<compile_context>
chip_gen: v7x
topology: tpu7x:2x2x1
jax: 0.10.0
libtpu: 0.0.40
codegen_flags: <defaults>
</compile_context>

<pallas_src>
import functools

import jax
import jax.numpy as jnp
from jax import lax
from jax.experimental import pallas as pl
from jax.experimental.pallas import tpu as pltpu


def _capsule_routing_kernel(x_ref, w_ref, same_u_ref, same_d_ref, v_ref, *,
                            num_iterations):
    """Prediction vectors + 3 routing iterations, fully lane-dense.

    Shapes (P = num_units * unit_size):
      x_ref:      (C, B, I)   channel-major input
      w_ref:      (C, P, I)   weights with (U, D) pre-flattened in the wrapper
      same_u_ref: (P, P)      one-hot [u(p) == u(p')]
      same_d_ref: (P, P)      one-hot [d(p) == d(p')]
      v_ref:      (B, P)      lane-dense output (reshaped to (B,U,D) outside)
    """
    C, B, _ = x_ref.shape
    _, P, _ = w_ref.shape

    x = x_ref[...]
    w = w_ref[...]
    same_u = same_u_ref[...]
    same_d = same_d_ref[...]

    # ---- prediction vectors: one C-batched MXU matmul -----------------------
    # u_hat[c, b, p] = sum_i x[c, b, i] * w[c, p, i]
    u_hat = lax.dot_general(
        x, w, dimension_numbers=(((2,), (2,)), ((0,), (0,))),
        preferred_element_type=jnp.float32)                       # (C, B, P)

    # ---- dynamic routing (logits shared across the batch, like the ref) -----
    # b_exp[c, p] holds b_ij[c, u(p)] expanded along the flat (u, d) lane axis.
    b_exp = jnp.zeros((C, P), jnp.float32)
    v = jnp.zeros((B, P), jnp.float32)
    inv_b = 1.0 / B

    for _ in range(num_iterations):
        # softmax over the in_channels axis  (== F.softmax(b_ij, dim=1))
        b_max = jnp.max(b_exp, axis=0, keepdims=True)
        e = jnp.exp(b_exp - b_max)
        c_exp = e / jnp.sum(e, axis=0, keepdims=True)              # (C, P)

        # s_j[b, p] = sum_c c_ij[c, u(p)] * u_hat[c, b, p]
        s = jnp.sum(c_exp[:, None, :] * u_hat, axis=0)             # (B, P)

        # squash -- the reference norms over the num_units axis (torch dim=2):
        # mag_sq[b, p] = sum_u s[b, u, d(p)]^2  ==  (s*s) @ same_d
        mag_sq = jnp.dot(s * s, same_d,
                         preferred_element_type=jnp.float32)       # (B, P)
        # mag_sq/(1+mag_sq) * s/mag  ==  s * mag/(1+mag_sq)  (no 0/0 divide)
        v = s * (jnp.sqrt(mag_sq) / (1.0 + mag_sq))                # (B, P)

        # agreement: uv[c, u] = mean_b sum_d u_hat[c,b,u,d] * v[b,u,d];
        # expanded over p it is ((sum_b u_hat * v) @ same_u) / B.
        t = jnp.sum(u_hat * v[None], axis=1)                       # (C, P)
        b_exp = b_exp + jnp.dot(t, same_u,
                                preferred_element_type=jnp.float32) * inv_b

    v_ref[...] = v


def capsule_layer_forward(x, W, num_iterations=3):
    """x: (B, in_units, in_channels); W: (1, in_channels, num_units, unit_size, in_units).

    Returns v of shape (B, num_units, unit_size), matching the torch module.
    """
    B, I, C = x.shape
    _, Cw, U, D, Iw = W.shape
    assert (Cw, Iw) == (C, I)
    P = U * D

    # Channel-major input + (U*D)-flattened weights so the prediction step is a
    # single batched MXU contraction and everything downstream stays lane-dense.
    x_k = jnp.transpose(x, (2, 0, 1)).astype(jnp.float32)          # (C, B, I)
    w_k = jnp.reshape(W[0].astype(jnp.float32), (C, P, I))         # (C, P, I)

    # Constant one-hot group matrices over the flattened p = u * D + d axis.
    p_ids = jnp.arange(P)
    same_u = (p_ids[:, None] // D == p_ids[None, :] // D).astype(jnp.float32)
    same_d = (p_ids[:, None] % D == p_ids[None, :] % D).astype(jnp.float32)

    kernel = functools.partial(_capsule_routing_kernel,
                               num_iterations=num_iterations)

    v_flat = pl.pallas_call(
        kernel,
        out_shape=jax.ShapeDtypeStruct((B, P), jnp.float32),
        grid=(1,),
        in_specs=[
            pl.BlockSpec((C, B, I), lambda i: (0, 0, 0)),
            pl.BlockSpec((C, P, I), lambda i: (0, 0, 0)),
            pl.BlockSpec((P, P), lambda i: (0, 0)),
            pl.BlockSpec((P, P), lambda i: (0, 0)),
        ],
        out_specs=pl.BlockSpec((B, P), lambda i: (0, 0)),
        compiler_params=pltpu.CompilerParams(
            dimension_semantics=("arbitrary",)),
    )(x_k, w_k, same_u, same_d)

    # NOTE: for large batches, add a "parallel" batch grid axis (v7x megacore)
    # plus a per-iteration cross-tile reduction of the routing logits (b_ij is
    # a batch mean in the reference) and tile u_hat over B to stay under VMEM.
    return v_flat.reshape(B, U, D)


def capsule_layer_reference(x, W):
    """Pure-JAX mirror of the torch forward pass (for correctness checking)."""
    x_t = jnp.transpose(x, (0, 2, 1))                              # (B, C, I)
    u_hat = jnp.einsum('cudi,bci->bcud', W[0], x_t)                # (B, C, U, D)
    B, C, U, D = u_hat.shape
    b_ij = jnp.zeros((C, U), jnp.float32)
    v = None
    for _ in range(3):
        c_ij = jax.nn.softmax(b_ij, axis=0)                        # (C, U)
        s = jnp.einsum('cu,bcud->bud', c_ij, u_hat)                # (B, U, D)
        mag_sq = jnp.sum(s * s, axis=1, keepdims=True)
        mag = jnp.sqrt(mag_sq)
        v = mag_sq / (1.0 + mag_sq) * (s / mag)
        uv = jnp.mean(jnp.einsum('bcud,bud->bcu', u_hat, v), axis=0)  # (C, U)
        b_ij = b_ij + uv
    return v


if __name__ == "__main__":
    # Small shapes consistent with the module's __init__ / forward.
    in_units, in_channels, num_units, unit_size = 8, 16, 4, 16
    batch = 2

    key = jax.random.PRNGKey(0)
    kx, kw = jax.random.split(key)
    x = jax.random.normal(kx, (batch, in_units, in_channels), dtype=jnp.float32)
    W = jax.random.normal(kw, (1, in_channels, num_units, unit_size, in_units),
                          dtype=jnp.float32)

    out = capsule_layer_forward(x, W)
    out = jax.block_until_ready(out)

    ref = capsule_layer_reference(x, W)
    assert out.shape == (batch, num_units, unit_size), out.shape
    # 1e-3 tolerance: kernel uses MXU f32 contractions, reference uses XLA
    # einsums; both are f32-accurate, margin covers accumulation-order diffs.
    assert jnp.allclose(out, ref, rtol=1e-3, atol=1e-3), \
        float(jnp.max(jnp.abs(out - ref)))

    print("KERNEL_OK")
</pallas_src>

<mosaic_0001>
module attributes {stable_mosaic.version = 11 : i64} {
  func.func @_capsule_routing_kernel(%arg0: i32, %arg1: memref<16x2x8xf32, #tpu.memory_space<vmem>>, %arg2: memref<16x64x8xf32, #tpu.memory_space<vmem>>, %arg3: memref<64x64xf32, #tpu.memory_space<vmem>>, %arg4: memref<64x64xf32, #tpu.memory_space<vmem>>, %arg5: memref<2x64xf32, #tpu.memory_space<vmem>>) attributes {dimension_semantics = [#tpu.dimension_semantics<arbitrary>], iteration_bounds = array<i64: 1>, scalar_prefetch = 0 : i64, scratch_operands = 0 : i64, tpu.core_type = #tpu.core_type<tc>, window_params = [{pipeline_mode = #tpu.pipeline_mode<synchronous>, transform_indices = @transform_0, window_bounds = array<i64: 16, 2, 8>}, {pipeline_mode = #tpu.pipeline_mode<synchronous>, transform_indices = @transform_1, window_bounds = array<i64: 16, 64, 8>}, {pipeline_mode = #tpu.pipeline_mode<synchronous>, transform_indices = @transform_2, window_bounds = array<i64: 64, 64>}, {pipeline_mode = #tpu.pipeline_mode<synchronous>, transform_indices = @transform_3, window_bounds = array<i64: 64, 64>}, {pipeline_mode = #tpu.pipeline_mode<synchronous>, transform_indices = @transform_4, window_bounds = array<i64: 2, 64>}]} {
    %c0 = arith.constant 0 : index
    %c0_0 = arith.constant 0 : index
    %c0_1 = arith.constant 0 : index
    %0 = vector.load %arg1[%c0, %c0_0, %c0_1] : memref<16x2x8xf32, #tpu.memory_space<vmem>>, vector<16x2x8xf32>
    %c0_2 = arith.constant 0 : index
    %c0_3 = arith.constant 0 : index
    %c0_4 = arith.constant 0 : index
    %1 = vector.load %arg2[%c0_2, %c0_3, %c0_4] : memref<16x64x8xf32, #tpu.memory_space<vmem>>, vector<16x64x8xf32>
    %c0_5 = arith.constant 0 : index
    %c0_6 = arith.constant 0 : index
    %2 = vector.load %arg3[%c0_5, %c0_6] : memref<64x64xf32, #tpu.memory_space<vmem>>, vector<64x64xf32>
    %c0_7 = arith.constant 0 : index
    %c0_8 = arith.constant 0 : index
    %3 = vector.load %arg4[%c0_7, %c0_8] : memref<64x64xf32, #tpu.memory_space<vmem>>, vector<64x64xf32>
    %cst = arith.constant dense<0.000000e+00> : vector<16x2x64xf32>
    %4 = tpu.matmul %0, %1, %cst {dimension_numbers = #tpu.dot_dimension_numbers<[2], [2], [1], [1], [0, 0, 0, 1, 1, 1], [0], [0]>} : vector<16x2x8xf32>, vector<16x64x8xf32>, vector<16x2x64xf32> -> vector<16x2x64xf32>
    %cst_9 = arith.constant 0.000000e+00 : f32
    %5 = vector.broadcast %cst_9 : f32 to vector<16x64xf32>
    %cst_10 = arith.constant dense<0xFF800000> : vector<64xf32>
    %6 = vector.multi_reduction <maximumf>, %5, %cst_10 [0] : vector<16x64xf32> to vector<64xf32>
    %7 = vector.shape_cast %6 : vector<64xf32> to vector<1x64xf32>
    %8 = vector.broadcast %7 : vector<1x64xf32> to vector<16x64xf32>
    %9 = arith.subf %5, %8 : vector<16x64xf32>
    %10 = math.exp %9 : vector<16x64xf32>
    %cst_11 = arith.constant dense<0.000000e+00> : vector<64xf32>
    %11 = vector.multi_reduction <add>, %10, %cst_11 [0] : vector<16x64xf32> to vector<64xf32>
    %12 = vector.shape_cast %11 : vector<64xf32> to vector<1x64xf32>
    %13 = vector.broadcast %12 : vector<1x64xf32> to vector<16x64xf32>
    %14 = arith.divf %10, %13 : vector<16x64xf32>
    %15 = vector.shape_cast %14 : vector<16x64xf32> to vector<16x1x64xf32>
    %16 = vector.broadcast %15 : vector<16x1x64xf32> to vector<16x2x64xf32>
    %17 = arith.mulf %16, %4 : vector<16x2x64xf32>
    %cst_12 = arith.constant dense<0.000000e+00> : vector<2x64xf32>
    %18 = vector.multi_reduction <add>, %17, %cst_12 [0] : vector<16x2x64xf32> to vector<2x64xf32>
    %19 = arith.mulf %18, %18 : vector<2x64xf32>
    %cst_13 = arith.constant dense<0.000000e+00> : vector<2x64xf32>
    %20 = tpu.matmul %19, %3, %cst_13 {dimension_numbers = #tpu.dot_dimension_numbers<[1], [0], [0], [1], [0, 0, 1, 1], [], []>} : vector<2x64xf32>, vector<64x64xf32>, vector<2x64xf32> -> vector<2x64xf32>
    %21 = math.sqrt %20 : vector<2x64xf32>
    %cst_14 = arith.constant 1.000000e+00 : f32
    %22 = vector.broadcast %cst_14 : f32 to vector<2x64xf32>
    %23 = arith.addf %22, %20 : vector<2x64xf32>
    %24 = arith.divf %21, %23 : vector<2x64xf32>
    %25 = arith.mulf %18, %24 : vector<2x64xf32>
    %26 = vector.shape_cast %25 : vector<2x64xf32> to vector<1x2x64xf32>
    %27 = vector.broadcast %26 : vector<1x2x64xf32> to vector<16x2x64xf32>
    %28 = arith.mulf %4, %27 : vector<16x2x64xf32>
    %cst_15 = arith.constant dense<0.000000e+00> : vector<16x64xf32>
    %29 = vector.multi_reduction <add>, %28, %cst_15 [1] : vector<16x2x64xf32> to vector<16x64xf32>
    %cst_16 = arith.constant dense<0.000000e+00> : vector<16x64xf32>
    %30 = tpu.matmul %29, %2, %cst_16 {dimension_numbers = #tpu.dot_dimension_numbers<[1], [0], [0], [1], [0, 0, 1, 1], [], []>} : vector<16x64xf32>, vector<64x64xf32>, vector<16x64xf32> -> vector<16x64xf32>
    %cst_17 = arith.constant 5.000000e-01 : f32
    %31 = vector.broadcast %cst_17 : f32 to vector<16x64xf32>
    %32 = arith.mulf %30, %31 : vector<16x64xf32>
    %33 = arith.addf %5, %32 : vector<16x64xf32>
    %cst_18 = arith.constant dense<0xFF800000> : vector<64xf32>
    %34 = vector.multi_reduction <maximumf>, %33, %cst_18 [0] : vector<16x64xf32> to vector<64xf32>
    %35 = vector.shape_cast %34 : vector<64xf32> to vector<1x64xf32>
    %36 = vector.broadcast %35 : vector<1x64xf32> to vector<16x64xf32>
    %37 = arith.subf %33, %36 : vector<16x64xf32>
    %38 = math.exp %37 : vector<16x64xf32>
    %cst_19 = arith.constant dense<0.000000e+00> : vector<64xf32>
    %39 = vector.multi_reduction <add>, %38, %cst_19 [0] : vector<16x64xf32> to vector<64xf32>
    %40 = vector.shape_cast %39 : vector<64xf32> to vector<1x64xf32>
    %41 = vector.broadcast %40 : vector<1x64xf32> to vector<16x64xf32>
    %42 = arith.divf %38, %41 : vector<16x64xf32>
    %43 = vector.shape_cast %42 : vector<16x64xf32> to vector<16x1x64xf32>
    %44 = vector.broadcast %43 : vector<16x1x64xf32> to vector<16x2x64xf32>
    %45 = arith.mulf %44, %4 : vector<16x2x64xf32>
    %cst_20 = arith.constant dense<0.000000e+00> : vector<2x64xf32>
    %46 = vector.multi_reduction <add>, %45, %cst_20 [0] : vector<16x2x64xf32> to vector<2x64xf32>
    %47 = arith.mulf %46, %46 : vector<2x64xf32>
    %cst_21 = arith.constant dense<0.000000e+00> : vector<2x64xf32>
    %48 = tpu.matmul %47, %3, %cst_21 {dimension_numbers = #tpu.dot_dimension_numbers<[1], [0], [0], [1], [0, 0, 1, 1], [], []>} : vector<2x64xf32>, vector<64x64xf32>, vector<2x64xf32> -> vector<2x64xf32>
    %49 = math.sqrt %48 : vector<2x64xf32>
    %cst_22 = arith.constant 1.000000e+00 : f32
    %50 = vector.broadcast %cst_22 : f32 to vector<2x64xf32>
    %51 = arith.addf %50, %48 : vector<2x64xf32>
    %52 = arith.divf %49, %51 : vector<2x64xf32>
    %53 = arith.mulf %46, %52 : vector<2x64xf32>
    %54 = vector.shape_cast %53 : vector<2x64xf32> to vector<1x2x64xf32>
    %55 = vector.broadcast %54 : vector<1x2x64xf32> to vector<16x2x64xf32>
    %56 = arith.mulf %4, %55 : vector<16x2x64xf32>
    %cst_23 = arith.constant dense<0.000000e+00> : vector<16x64xf32>
    %57 = vector.multi_reduction <add>, %56, %cst_23 [1] : vector<16x2x64xf32> to vector<16x64xf32>
    %cst_24 = arith.constant dense<0.000000e+00> : vector<16x64xf32>
    %58 = tpu.matmul %57, %2, %cst_24 {dimension_numbers = #tpu.dot_dimension_numbers<[1], [0], [0], [1], [0, 0, 1, 1], [], []>} : vector<16x64xf32>, vector<64x64xf32>, vector<16x64xf32> -> vector<16x64xf32>
    %cst_25 = arith.constant 5.000000e-01 : f32
    %59 = vector.broadcast %cst_25 : f32 to vector<16x64xf32>
    %60 = arith.mulf %58, %59 : vector<16x64xf32>
    %61 = arith.addf %33, %60 : vector<16x64xf32>
    %cst_26 = arith.constant dense<0xFF800000> : vector<64xf32>
    %62 = vector.multi_reduction <maximumf>, %61, %cst_26 [0] : vector<16x64xf32> to vector<64xf32>
    %63 = vector.shape_cast %62 : vector<64xf32> to vector<1x64xf32>
    %64 = vector.broadcast %63 : vector<1x64xf32> to vector<16x64xf32>
    %65 = arith.subf %61, %64 : vector<16x64xf32>
    %66 = math.exp %65 : vector<16x64xf32>
    %cst_27 = arith.constant dense<0.000000e+00> : vector<64xf32>
    %67 = vector.multi_reduction <add>, %66, %cst_27 [0] : vector<16x64xf32> to vector<64xf32>
    %68 = vector.shape_cast %67 : vector<64xf32> to vector<1x64xf32>
    %69 = vector.broadcast %68 : vector<1x64xf32> to vector<16x64xf32>
    %70 = arith.divf %66, %69 : vector<16x64xf32>
    %71 = vector.shape_cast %70 : vector<16x64xf32> to vector<16x1x64xf32>
    %72 = vector.broadcast %71 : vector<16x1x64xf32> to vector<16x2x64xf32>
    %73 = arith.mulf %72, %4 : vector<16x2x64xf32>
    %cst_28 = arith.constant dense<0.000000e+00> : vector<2x64xf32>
    %74 = vector.multi_reduction <add>, %73, %cst_28 [0] : vector<16x2x64xf32> to vector<2x64xf32>
    %75 = arith.mulf %74, %74 : vector<2x64xf32>
    %cst_29 = arith.constant dense<0.000000e+00> : vector<2x64xf32>
    %76 = tpu.matmul %75, %3, %cst_29 {dimension_numbers = #tpu.dot_dimension_numbers<[1], [0], [0], [1], [0, 0, 1, 1], [], []>} : vector<2x64xf32>, vector<64x64xf32>, vector<2x64xf32> -> vector<2x64xf32>
    %77 = math.sqrt %76 : vector<2x64xf32>
    %cst_30 = arith.constant 1.000000e+00 : f32
    %78 = vector.broadcast %cst_30 : f32 to vector<2x64xf32>
    %79 = arith.addf %78, %76 : vector<2x64xf32>
    %80 = arith.divf %77, %79 : vector<2x64xf32>
    %81 = arith.mulf %74, %80 : vector<2x64xf32>
    %c0_31 = arith.constant 0 : index
    %c0_32 = arith.constant 0 : index
    %82 = vector.load %arg5[%c0_31, %c0_32] : memref<2x64xf32, #tpu.memory_space<vmem>>, vector<2x64xf32>
    tpu.vector_store %arg5[%c0_31, %c0_32], %81 {strides = array<i32>} : memref<2x64xf32, #tpu.memory_space<vmem>>, vector<2x64xf32>,
    return
  }
  func.func @transform_0(%arg0: i32) -> (i32, i32, i32) {
    %c0_i32 = arith.constant 0 : i32
    %c0_i32_0 = arith.constant 0 : i32
    %c0_i32_1 = arith.constant 0 : i32
    %c0_i32_2 = arith.constant 0 : i32
    return %c0_i32, %c0_i32_0, %c0_i32_1 : i32, i32, i32
  }
  func.func @transform_1(%arg0: i32) -> (i32, i32, i32) {
    %c0_i32 = arith.constant 0 : i32
    %c0_i32_0 = arith.constant 0 : i32
    %c0_i32_1 = arith.constant 0 : i32
    %c0_i32_2 = arith.constant 0 : i32
    return %c0_i32, %c0_i32_0, %c0_i32_1 : i32, i32, i32
  }
  func.func @transform_2(%arg0: i32) -> (i32, i32) {
    %c0_i32 = arith.constant 0 : i32
    %c0_i32_0 = arith.constant 0 : i32
    %c0_i32_1 = arith.constant 0 : i32
    return %c0_i32, %c0_i32_0 : i32, i32
  }
  func.func @transform_3(%arg0: i32) -> (i32, i32) {
    %c0_i32 = arith.constant 0 : i32
    %c0_i32_0 = arith.constant 0 : i32
    %c0_i32_1 = arith.constant 0 : i32
    return %c0_i32, %c0_i32_0 : i32, i32
  }
  func.func @transform_4(%arg0: i32) -> (i32, i32) {
    %c0_i32 = arith.constant 0 : i32
    %c0_i32_0 = arith.constant 0 : i32
    %c0_i32_1 = arith.constant 0 : i32
    return %c0_i32, %c0_i32_0 : i32, i32
  }
}

</mosaic_0001>

<llo_original>
// kernel: tpu_custom_call.1
$region0: #{tpu_custom_call.1}
  #allocation0 [shape = 'u32[]', space=smem, size = 0x4, offset = 0x4, fixed_abs, tag = 'smem constant byte address 0x4 - core index']
  #allocation1 [shape = 'u32[144,128]{1,0:T(1,128)}', space=vmem, size = 0x12000, scoped, tag = 'internal scratch']
  %s0 = inlined_call_operand.vmem [shape: f32[16,2,8], index: 0, kind: input, shape index: {}]
  %s1 = inlined_call_operand.vmem [shape: f32[16,64,8], index: 1, kind: input, shape index: {}]
  %s2 = inlined_call_operand.vmem [shape: f32[64,64], index: 2, kind: input, shape index: {}]
  %s3 = inlined_call_operand.vmem [shape: f32[64,64], index: 3, kind: input, shape index: {}]
  %s4 = inlined_call_operand.hbm [shape: f32[2,64], index: 4, kind: output, shape index: {}]
  %s5 = sld [smem:[#allocation0]]
  $region26: #{tpu_custom_call.1} parent=0
    _
  %s7 = ssub.s32 1, %s5
  %s8 = scalar_select 0, %s7, %s5
  $region1: #{tpu_custom_call.1} parent=0
    #allocation2 [shape = 'u8[1024]{0}', space=vmem, size = 0x400, scoped, tag = 'output window, operand 0, single buffered']
    #allocation3 [shape = 's32[1]{0}', space=sflag, size = 0x4, scoped, tag = 'scoped memory for tpu_custom_call.1']
    %9 = vsyncpa [#allocation3], 0
    // Predicated region
    $region2: #{tpu_custom_call.1} parent=1 // pred_check
      _
    $region3: #{tpu_custom_call.1} parent=1 // pred_check_branch
      %11 = sbr.rel (0) target = $region5
    $region4: #{tpu_custom_call.1} parent=1 // pred_region
      _
    $region5: #{tpu_custom_call.1} parent=1 // pred_fallthru
      _
    // Predicated region
    $region6: #{tpu_custom_call.1} parent=1 // pred_check
      _
    $region7: #{tpu_custom_call.1} parent=1 // pred_check_branch
      %13 = sbr.rel (0) target = $region9
    $region8: #{tpu_custom_call.1} parent=1 // pred_region
      _
    $region9: #{tpu_custom_call.1} parent=1 // pred_fallthru
      _
    // Predicated region
    $region10: #{tpu_custom_call.1} parent=1 // pred_check
      _
    $region11: #{tpu_custom_call.1} parent=1 // pred_check_branch
      %15 = sbr.rel (0) target = $region13
    $region12: #{tpu_custom_call.1} parent=1 // pred_region
      _
    $region13: #{tpu_custom_call.1} parent=1 // pred_fallthru
      _
    // Predicated region
    $region14: #{tpu_custom_call.1} parent=1 // pred_check
      _
    $region15: #{tpu_custom_call.1} parent=1 // pred_check_branch
      %17 = sbr.rel (0) target = $region17
    $region16: #{tpu_custom_call.1} parent=1 // pred_region
      _
    $region17: #{tpu_custom_call.1} parent=1 // pred_fallthru
      _
    %v18 = vld [vmem:[%s0] sm:$0x3]
    %v19 = vld [vmem:[%s0 + $0x2] sm:$0x3]
    %v20 = vld [vmem:[%s0 + $0x4] sm:$0x3]
    %v21 = vld [vmem:[%s0 + $0x6] sm:$0x3]
    %v22 = vld [vmem:[%s0 + $0x8] sm:$0x3]
    %v23 = vld [vmem:[%s0 + $0xa] sm:$0x3]
    %v24 = vld [vmem:[%s0 + $0xc] sm:$0x3]
    %v25 = vld [vmem:[%s0 + $0xe] sm:$0x3]
    %v26 = vld [vmem:[%s0 + $0x10] sm:$0x3]
    %v27 = vld [vmem:[%s0 + $0x12] sm:$0x3]
    %v28 = vld [vmem:[%s0 + $0x14] sm:$0x3]
    %v29 = vld [vmem:[%s0 + $0x16] sm:$0x3]
    %v30 = vld [vmem:[%s0 + $0x18] sm:$0x3]
    %v31 = vld [vmem:[%s0 + $0x1a] sm:$0x3]
    %v32 = vld [vmem:[%s0 + $0x1c] sm:$0x3]
    %v33 = vld [vmem:[%s0 + $0x1e] sm:$0x3]
    %v34 = vld [vmem:[%s1] sm:$0xff]
    %v35 = vld [vmem:[%s1 + $0x8] sm:$0xff]
    %v36 = vld [vmem:[%s1 + $0x10] sm:$0xff]
    %v37 = vld [vmem:[%s1 + $0x18] sm:$0xff]
    %v38 = vld [vmem:[%s1 + $0x20] sm:$0xff]
    %v39 = vld [vmem:[%s1 + $0x28] sm:$0xff]
    %v40 = vld [vmem:[%s1 + $0x30] sm:$0xff]
    %v41 = vld [vmem:[%s1 + $0x38] sm:$0xff]
    %v42 = vld [vmem:[%s1 + $0x40] sm:$0xff]
    %v43 = vld [vmem:[%s1 + $0x48] sm:$0xff]
    %v44 = vld [vmem:[%s1 + $0x50] sm:$0xff]
    %v45 = vld [vmem:[%s1 + $0x58] sm:$0xff]
    %v46 = vld [vmem:[%s1 + $0x60] sm:$0xff]
    %v47 = vld [vmem:[%s1 + $0x68] sm:$0xff]
    %v48 = vld [vmem:[%s1 + $0x70] sm:$0xff]
    %v49 = vld [vmem:[%s1 + $0x78] sm:$0xff]
    %v50 = vld [vmem:[%s1 + $0x80] sm:$0xff]
    %v51 = vld [vmem:[%s1 + $0x88] sm:$0xff]
    %v52 = vld [vmem:[%s1 + $0x90] sm:$0xff]
    %v53 = vld [vmem:[%s1 + $0x98] sm:$0xff]
    %v54 = vld [vmem:[%s1 + $0xa0] sm:$0xff]
    %v55 = vld [vmem:[%s1 + $0xa8] sm:$0xff]
    %v56 = vld [vmem:[%s1 + $0xb0] sm:$0xff]
    %v57 = vld [vmem:[%s1 + $0xb8] sm:$0xff]
    %v58 = vld [vmem:[%s1 + $0xc0] sm:$0xff]
    %v59 = vld [vmem:[%s1 + $0xc8] sm:$0xff]
    %v60 = vld [vmem:[%s1 + $0xd0] sm:$0xff]
    %v61 = vld [vmem:[%s1 + $0xd8] sm:$0xff]
    %v62 = vld [vmem:[%s1 + $0xe0] sm:$0xff]
    %v63 = vld [vmem:[%s1 + $0xe8] sm:$0xff]
    %v64 = vld [vmem:[%s1 + $0xf0] sm:$0xff]
    %v65 = vld [vmem:[%s1 + $0xf8] sm:$0xff]
    %v66 = vld [vmem:[%s1 + $0x100] sm:$0xff]
    %v67 = vld [vmem:[%s1 + $0x108] sm:$0xff]
    %v68 = vld [vmem:[%s1 + $0x110] sm:$0xff]
    %v69 = vld [vmem:[%s1 + $0x118] sm:$0xff]
    %v70 = vld [vmem:[%s1 + $0x120] sm:$0xff]
    %v71 = vld [vmem:[%s1 + $0x128] sm:$0xff]
    %v72 = vld [vmem:[%s1 + $0x130] sm:$0xff]
    %v73 = vld [vmem:[%s1 + $0x138] sm:$0xff]
    %v74 = vld [vmem:[%s1 + $0x140] sm:$0xff]
    %v75 = vld [vmem:[%s1 + $0x148] sm:$0xff]
    %v76 = vld [vmem:[%s1 + $0x150] sm:$0xff]
    %v77 = vld [vmem:[%s1 + $0x158] sm:$0xff]
    %v78 = vld [vmem:[%s1 + $0x160] sm:$0xff]
    %v79 = vld [vmem:[%s1 + $0x168] sm:$0xff]
    %v80 = vld [vmem:[%s1 + $0x170] sm:$0xff]
    %v81 = vld [vmem:[%s1 + $0x178] sm:$0xff]
    %v82 = vld [vmem:[%s1 + $0x180] sm:$0xff]
    %v83 = vld [vmem:[%s1 + $0x188] sm:$0xff]
    %v84 = vld [vmem:[%s1 + $0x190] sm:$0xff]
    %v85 = vld [vmem:[%s1 + $0x198] sm:$0xff]
    %v86 = vld [vmem:[%s1 + $0x1a0] sm:$0xff]
    %v87 = vld [vmem:[%s1 + $0x1a8] sm:$0xff]
    %v88 = vld [vmem:[%s1 + $0x1b0] sm:$0xff]
    %v89 = vld [vmem:[%s1 + $0x1b8] sm:$0xff]
    %v90 = vld [vmem:[%s1 + $0x1c0] sm:$0xff]
    %v91 = vld [vmem:[%s1 + $0x1c8] sm:$0xff]
    %v92 = vld [vmem:[%s1 + $0x1d0] sm:$0xff]
    %v93 = vld [vmem:[%s1 + $0x1d8] sm:$0xff]
    %v94 = vld [vmem:[%s1 + $0x1e0] sm:$0xff]
    %v95 = vld [vmem:[%s1 + $0x1e8] sm:$0xff]
    %v96 = vld [vmem:[%s1 + $0x1f0] sm:$0xff]
    %v97 = vld [vmem:[%s1 + $0x1f8] sm:$0xff]
    %v98 = vld [vmem:[%s1 + $0x200] sm:$0xff]
    %v99 = vld [vmem:[%s1 + $0x208] sm:$0xff]
    %v100 = vld [vmem:[%s1 + $0x210] sm:$0xff]
    %v101 = vld [vmem:[%s1 + $0x218] sm:$0xff]
    %v102 = vld [vmem:[%s1 + $0x220] sm:$0xff]
    %v103 = vld [vmem:[%s1 + $0x228] sm:$0xff]
    %v104 = vld [vmem:[%s1 + $0x230] sm:$0xff]
    %v105 = vld [vmem:[%s1 + $0x238] sm:$0xff]
    %v106 = vld [vmem:[%s1 + $0x240] sm:$0xff]
    %v107 = vld [vmem:[%s1 + $0x248] sm:$0xff]
    %v108 = vld [vmem:[%s1 + $0x250] sm:$0xff]
    %v109 = vld [vmem:[%s1 + $0x258] sm:$0xff]
    %v110 = vld [vmem:[%s1 + $0x260] sm:$0xff]
    %v111 = vld [vmem:[%s1 + $0x268] sm:$0xff]
    %v112 = vld [vmem:[%s1 + $0x270] sm:$0xff]
    %v113 = vld [vmem:[%s1 + $0x278] sm:$0xff]
    %v114 = vld [vmem:[%s1 + $0x280] sm:$0xff]
    %v115 = vld [vmem:[%s1 + $0x288] sm:$0xff]
    %v116 = vld [vmem:[%s1 + $0x290] sm:$0xff]
    %v117 = vld [vmem:[%s1 + $0x298] sm:$0xff]
    %v118 = vld [vmem:[%s1 + $0x2a0] sm:$0xff]
    %v119 = vld [vmem:[%s1 + $0x2a8] sm:$0xff]
    %v120 = vld [vmem:[%s1 + $0x2b0] sm:$0xff]
    %v121 = vld [vmem:[%s1 + $0x2b8] sm:$0xff]
    %v122 = vld [vmem:[%s1 + $0x2c0] sm:$0xff]
    %v123 = vld [vmem:[%s1 + $0x2c8] sm:$0xff]
    %v124 = vld [vmem:[%s1 + $0x2d0] sm:$0xff]
    %v125 = vld [vmem:[%s1 + $0x2d8] sm:$0xff]
    %v126 = vld [vmem:[%s1 + $0x2e0] sm:$0xff]
    %v127 = vld [vmem:[%s1 + $0x2e8] sm:$0xff]
    %v128 = vld [vmem:[%s1 + $0x2f0] sm:$0xff]
    %v129 = vld [vmem:[%s1 + $0x2f8] sm:$0xff]
    %v130 = vld [vmem:[%s1 + $0x300] sm:$0xff]
    %v131 = vld [vmem:[%s1 + $0x308] sm:$0xff]
    %v132 = vld [vmem:[%s1 + $0x310] sm:$0xff]
    %v133 = vld [vmem:[%s1 + $0x318] sm:$0xff]
    %v134 = vld [vmem:[%s1 + $0x320] sm:$0xff]
    %v135 = vld [vmem:[%s1 + $0x328] sm:$0xff]
    %v136 = vld [vmem:[%s1 + $0x330] sm:$0xff]
    %v137 = vld [vmem:[%s1 + $0x338] sm:$0xff]
    %v138 = vld [vmem:[%s1 + $0x340] sm:$0xff]
    %v139 = vld [vmem:[%s1 + $0x348] sm:$0xff]
    %v140 = vld [vmem:[%s1 + $0x350] sm:$0xff]
    %v141 = vld [vmem:[%s1 + $0x358] sm:$0xff]
    %v142 = vld [vmem:[%s1 + $0x360] sm:$0xff]
    %v143 = vld [vmem:[%s1 + $0x368] sm:$0xff]
    %v144 = vld [vmem:[%s1 + $0x370] sm:$0xff]
    %v145 = vld [vmem:[%s1 + $0x378] sm:$0xff]
    %v146 = vld [vmem:[%s1 + $0x380] sm:$0xff]
    %v147 = vld [vmem:[%s1 + $0x388] sm:$0xff]
    %v148 = vld [vmem:[%s1 + $0x390] sm:$0xff]
    %v149 = vld [vmem:[%s1 + $0x398] sm:$0xff]
    %v150 = vld [vmem:[%s1 + $0x3a0] sm:$0xff]
    %v151 = vld [vmem:[%s1 + $0x3a8] sm:$0xff]
    %v152 = vld [vmem:[%s1 + $0x3b0] sm:$0xff]
    %v153 = vld [vmem:[%s1 + $0x3b8] sm:$0xff]
    %v154 = vld [vmem:[%s1 + $0x3c0] sm:$0xff]
    %v155 = vld [vmem:[%s1 + $0x3c8] sm:$0xff]
    %v156 = vld [vmem:[%s1 + $0x3d0] sm:$0xff]
    %v157 = vld [vmem:[%s1 + $0x3d8] sm:$0xff]
    %v158 = vld [vmem:[%s1 + $0x3e0] sm:$0xff]
    %v159 = vld [vmem:[%s1 + $0x3e8] sm:$0xff]
    %v160 = vld [vmem:[%s1 + $0x3f0] sm:$0xff]
    %v161 = vld [vmem:[%s1 + $0x3f8] sm:$0xff]
    %v162 = vld [vmem:[%s2] sm:$0xff]
    %v163 = vld [vmem:[%s2 + $0x8] sm:$0xff]
    %v164 = vld [vmem:[%s2 + $0x10] sm:$0xff]
    %v165 = vld [vmem:[%s2 + $0x18] sm:$0xff]
    %v166 = vld [vmem:[%s2 + $0x20] sm:$0xff]
    %v167 = vld [vmem:[%s2 + $0x28] sm:$0xff]
    %v168 = vld [vmem:[%s2 + $0x30] sm:$0xff]
    %v169 = vld [vmem:[%s2 + $0x38] sm:$0xff]
    %v170 = vld [vmem:[%s3] sm:$0xff]
    %v171 = vld [vmem:[%s3 + $0x8] sm:$0xff]
    %v172 = vld [vmem:[%s3 + $0x10] sm:$0xff]
    %v173 = vld [vmem:[%s3 + $0x18] sm:$0xff]
    %v174 = vld [vmem:[%s3 + $0x20] sm:$0xff]
    %v175 = vld [vmem:[%s3 + $0x28] sm:$0xff]
    %v176 = vld [vmem:[%s3 + $0x30] sm:$0xff]
    %v177 = vld [vmem:[%s3 + $0x38] sm:$0xff]
    %vm178 = vcmask 64512
    %v180 = vsel %vm178, %v18, 0
    %v183 = vsel %vm178, %v34, 0
    %v186 = vsel %vm178, %v35, 0
    %v189 = vsel %vm178, %v36, 0
    %v192 = vsel %vm178, %v37, 0
    %v195 = vsel %vm178, %v38, 0
    %v198 = vsel %vm178, %v39, 0
    %v201 = vsel %vm178, %v40, 0
    %v204 = vsel %vm178, %v41, 0
    %206 = vmatprep.subr.mxu0 0.0
    %207 = vmatpush1.xpose.msra.mxu0 %v183
    %208 = vmatprep.subr.mxu0 0.0
    %209 = vmatpush1.xpose.msra.mxu0 %v186
    %210 = vmatprep.subr.mxu0 0.0
    %211 = vmatpush1.xpose.msra.mxu0 %v189
    %212 = vmatprep.subr.mxu0 0.0
    %213 = vmatpush1.xpose.msra.mxu0 %v192
    %214 = vmatprep.subr.mxu0 0.0
    %215 = vmatpush1.xpose.msra.mxu0 %v195
    %216 = vmatprep.subr.mxu0 0.0
    %217 = vmatpush1.xpose.msra.mxu0 %v198
    %218 = vmatprep.subr.mxu0 0.0
    %219 = vmatpush1.xpose.msra.mxu0 %v201
    %220 = vmatprep.subr.mxu0 0.0
    %221 = vmatpush1.xpose.msra.mxu0 %v204
    %222 = vmatprep.subr.mxu0 0.0
    %223 = vmatpush1.xpose.msra.mxu0 0.0
    %224 = vmatprep.subr.mxu0 0.0
    %225 = vmatpush1.xpose.msra.mxu0 0.0
    %226 = vmatprep.subr.mxu0 0.0
    %227 = vmatpush1.xpose.msra.mxu0 0.0
    %228 = vmatprep.subr.mxu0 0.0
    %229 = vmatpush1.xpose.msra.mxu0 0.0
    %230 = vmatprep.subr.mxu0 0.0
    %231 = vmatpush1.xpose.msra.mxu0 0.0
    %232 = vmatprep.subr.mxu0 0.0
    %233 = vmatpush1.xpose.msra.mxu0 0.0
    %234 = vmatprep.subr.mxu0 0.0
    %235 = vmatpush1.xpose.msra.mxu0 0.0
    %236 = vmatprep.subr.mxu0 0.0
    %237 = vmatpush1.xpose.msra.mxu0 0.0
    %238 = vmatprep.subr.mxu0 0.0
    %239 = vmatpush1.xpose.msra.mxu0 0.0
    %240 = vmatprep.subr.mxu0 0.0
    %241 = vmatpush1.xpose.msra.mxu0 0.0
    %242 = vmatprep.subr.mxu0 0.0
    %243 = vmatpush1.xpose.msra.mxu0 0.0
    %244 = vmatprep.subr.mxu0 0.0
    %245 = vmatpush1.xpose.msra.mxu0 0.0
    %246 = vmatprep.subr.mxu0 0.0
    %247 = vmatpush1.xpose.msra.mxu0 0.0
    %248 = vmatprep.subr.mxu0 0.0
    %249 = vmatpush1.xpose.msra.mxu0 0.0
    %250 = vmatprep.subr.mxu0 0.0
    %251 = vmatpush1.xpose.msra.mxu0 0.0
    %252 = vmatprep.subr.mxu0 0.0
    %253 = vmatpush1.xpose.msra.mxu0 0.0
    %254 = vmatprep.subr.mxu0 0.0
    %255 = vmatpush1.xpose.msra.mxu0 0.0
    %256 = vmatprep.subr.mxu0 0.0
    %257 = vmatpush1.xpose.msra.mxu0 0.0
    %258 = vmatprep.subr.mxu0 0.0
    %259 = vmatpush1.xpose.msra.mxu0 0.0
    %260 = vmatprep.subr.mxu0 0.0
    %261 = vmatpush1.xpose.msra.mxu0 0.0
    %262 = vmatprep.subr.mxu0 0.0
    %263 = vmatpush1.xpose.msra.mxu0 0.0
    %264 = vmatprep.subr.mxu0 0.0
    %265 = vmatpush1.xpose.msra.mxu0 0.0
    %266 = vmatprep.subr.mxu0 0.0
    %267 = vmatpush1.xpose.msra.mxu0 0.0
    %268 = vmatprep.subr.mxu0 0.0
    %269 = vmatpush1.xpose.msra.mxu0 0.0
    %270 = vmatprep.mubr.f32.mxu0 0.0
    %271 = vmatmul.mubr.f32.gmra.mrb[0].mxu0 %v180
    %v272 = vpop.f32.mrb[0].mxu0
    %v273 = vadd.f32 0.0, %v272
    %v274 = vpop.f32.mrb[0].mxu0
    %275 = vdwg.mxu0
    %v277 = vsel %vm178, %v19, 0
    %v280 = vsel %vm178, %v42, 0
    %v283 = vsel %vm178, %v43, 0
    %v286 = vsel %vm178, %v44, 0
    %v289 = vsel %vm178, %v45, 0
    %v292 = vsel %vm178, %v46, 0
    %v295 = vsel %vm178, %v47, 0
    %v298 = vsel %vm178, %v48, 0
    %v301 = vsel %vm178, %v49, 0
    %303 = vmatprep.subr.mxu0 0.0
    %304 = vmatpush1.xpose.msra.mxu0 %v280
    %305 = vmatprep.subr.mxu0 0.0
    %306 = vmatpush1.xpose.msra.mxu0 %v283
    %307 = vmatprep.subr.mxu0 0.0
    %308 = vmatpush1.xpose.msra.mxu0 %v286
    %309 = vmatprep.subr.mxu0 0.0
    %310 = vmatpush1.xpose.msra.mxu0 %v289
    %311 = vmatprep.subr.mxu0 0.0
    %312 = vmatpush1.xpose.msra.mxu0 %v292
    %313 = vmatprep.subr.mxu0 0.0
    %314 = vmatpush1.xpose.msra.mxu0 %v295
    %315 = vmatprep.subr.mxu0 0.0
    %316 = vmatpush1.xpose.msra.mxu0 %v298
    %317 = vmatprep.subr.mxu0 0.0
    %318 = vmatpush1.xpose.msra.mxu0 %v301
    %319 = vmatprep.subr.mxu0 0.0
    %320 = vmatpush1.xpose.msra.mxu0 0.0
    %321 = vmatprep.subr.mxu0 0.0
    %322 = vmatpush1.xpose.msra.mxu0 0.0
    %323 = vmatprep.subr.mxu0 0.0
    %324 = vmatpush1.xpose.msra.mxu0 0.0
    %325 = vmatprep.subr.mxu0 0.0
    %326 = vmatpush1.xpose.msra.mxu0 0.0
    %327 = vmatprep.subr.mxu0 0.0
    %328 = vmatpush1.xpose.msra.mxu0 0.0
    %329 = vmatprep.subr.mxu0 0.0
    %330 = vmatpush1.xpose.msra.mxu0 0.0
    %331 = vmatprep.subr.mxu0 0.0
    %332 = vmatpush1.xpose.msra.mxu0 0.0
    %333 = vmatprep.subr.mxu0 0.0
    %334 = vmatpush1.xpose.msra.mxu0 0.0
    %335 = vmatprep.subr.mxu0 0.0
    %336 = vmatpush1.xpose.msra.mxu0 0.0
    %337 = vmatprep.subr.mxu0 0.0
    %338 = vmatpush1.xpose.msra.mxu0 0.0
    %339 = vmatprep.subr.mxu0 0.0
    %340 = vmatpush1.xpose.msra.mxu0 0.0
    %341 = vmatprep.subr.mxu0 0.0
    %342 = vmatpush1.xpose.msra.mxu0 0.0
    %343 = vmatprep.subr.mxu0 0.0
    %344 = vmatpush1.xpose.msra.mxu0 0.0
    %345 = vmatprep.subr.mxu0 0.0
    %346 = vmatpush1.xpose.msra.mxu0 0.0
    %347 = vmatprep.subr.mxu0 0.0
    %348 = vmatpush1.xpose.msra.mxu0 0.0
    %349 = vmatprep.subr.mxu0 0.0
    %350 = vmatpush1.xpose.msra.mxu0 0.0
    %351 = vmatprep.subr.mxu0 0.0
    %352 = vmatpush1.xpose.msra.mxu0 0.0
    %353 = vmatprep.subr.mxu0 0.0
    %354 = vmatpush1.xpose.msra.mxu0 0.0
    %355 = vmatprep.subr.mxu0 0.0
    %356 = vmatpush1.xpose.msra.mxu0 0.0
    %357 = vmatprep.subr.mxu0 0.0
    %358 = vmatpush1.xpose.msra.mxu0 0.0
    %359 = vmatprep.subr.mxu0 0.0
    %360 = vmatpush1.xpose.msra.mxu0 0.0
    %361 = vmatprep.subr.mxu0 0.0
    %362 = vmatpush1.xpose.msra.mxu0 0.0
    %363 = vmatprep.subr.mxu0 0.0
    %364 = vmatpush1.xpose.msra.mxu0 0.0
    %365 = vmatprep.subr.mxu0 0.0
    %366 = vmatpush1.xpose.msra.mxu0 0.0
    %367 = vmatprep.mubr.f32.mxu0 0.0
    %368 = vmatmul.mubr.f32.gmra.mrb[0].mxu0 %v277
    %v369 = vpop.f32.mrb[0].mxu0
    %v370 = vadd.f32 0.0, %v369
    %v371 = vpop.f32.mrb[0].mxu0
    %372 = vdwg.mxu0
    %v374 = vsel %vm178, %v20, 0
    %v377 = vsel %vm178, %v50, 0
    %v380 = vsel %vm178, %v51, 0
    %v383 = vsel %vm178, %v52, 0
    %v386 = vsel %vm178, %v53, 0
    %v389 = vsel %vm178, %v54, 0
    %v392 = vsel %vm178, %v55, 0
    %v395 = vsel %vm178, %v56, 0
    %v398 = vsel %vm178, %v57, 0
    %400 = vmatprep.subr.mxu0 0.0
    %401 = vmatpush1.xpose.msra.mxu0 %v377
    %402 = vmatprep.subr.mxu0 0.0
    %403 = vmatpush1.xpose.msra.mxu0 %v380
    %404 = vmatprep.subr.mxu0 0.0
    %405 = vmatpush1.xpose.msra.mxu0 %v383
    %406 = vmatprep.subr.mxu0 0.0
    %407 = vmatpush1.xpose.msra.mxu0 %v386
    %408 = vmatprep.subr.mxu0 0.0
    %409 = vmatpush1.xpose.msra.mxu0 %v389
    %410 = vmatprep.subr.mxu0 0.0
    %411 = vmatpush1.xpose.msra.mxu0 %v392
    %412 = vmatprep.subr.mxu0 0.0
    %413 = vmatpush1.xpose.msra.mxu0 %v395
    %414 = vmatprep.subr.mxu0 0.0
    %415 = vmatpush1.xpose.msra.mxu0 %v398
    %416 = vmatprep.subr.mxu0 0.0
    %417 = vmatpush1.xpose.msra.mxu0 0.0
    %418 = vmatprep.subr.mxu0 0.0
    %419 = vmatpush1.xpose.msra.mxu0 0.0
    %420 = vmatprep.subr.mxu0 0.0
    %421 = vmatpush1.xpose.msra.mxu0 0.0
    %422 = vmatprep.subr.mxu0 0.0
    %423 = vmatpush1.xpose.msra.mxu0 0.0
    %424 = vmatprep.subr.mxu0 0.0
    %425 = vmatpush1.xpose.msra.mxu0 0.0
    %426 = vmatprep.subr.mxu0 0.0
    %427 = vmatpush1.xpose.msra.mxu0 0.0
    %428 = vmatprep.subr.mxu0 0.0
    %429 = vmatpush1.xpose.msra.mxu0 0.0
    %430 = vmatprep.subr.mxu0 0.0
    %431 = vmatpush1.xpose.msra.mxu0 0.0
    %432 = vmatprep.subr.mxu0 0.0
    %433 = vmatpush1.xpose.msra.mxu0 0.0
    %434 = vmatprep.subr.mxu0 0.0
    %435 = vmatpush1.xpose.msra.mxu0 0.0
    %436 = vmatprep.subr.mxu0 0.0
    %437 = vmatpush1.xpose.msra.mxu0 0.0
    %438 = vmatprep.subr.mxu0 0.0
    %439 = vmatpush1.xpose.msra.mxu0 0.0
    %440 = vmatprep.subr.mxu0 0.0
    %441 = vmatpush1.xpose.msra.mxu0 0.0
    %442 = vmatprep.subr.mxu0 0.0
    %443 = vmatpush1.xpose.msra.mxu0 0.0
    %444 = vmatprep.subr.mxu0 0.0
    %445 = vmatpush1.xpose.msra.mxu0 0.0
    %446 = vmatprep.subr.mxu0 0.0
    %447 = vmatpush1.xpose.msra.mxu0 0.0
    %448 = vmatprep.subr.mxu0 0.0
    %449 = vmatpush1.xpose.msra.mxu0 0.0
    %450 = vmatprep.subr.mxu0 0.0
    %451 = vmatpush1.xpose.msra.mxu0 0.0
    %452 = vmatprep.subr.mxu0 0.0
    %453 = vmatpush1.xpose.msra.mxu0 0.0
    %454 = vmatprep.subr.mxu0 0.0
    %455 = vmatpush1.xpose.msra.mxu0 0.0
    %456 = vmatprep.subr.mxu0 0.0
    %457 = vmatpush1.xpose.msra.mxu0 0.0
    %458 = vmatprep.subr.mxu0 0.0
    %459 = vmatpush1.xpose.msra.mxu0 0.0
    %460 = vmatprep.subr.mxu0 0.0
    %461 = vmatpush1.xpose.msra.mxu0 0.0
    %462 = vmatprep.subr.mxu0 0.0
    %463 = vmatpush1.xpose.msra.mxu0 0.0
    %464 = vmatprep.mubr.f32.mxu0 0.0
    %465 = vmatmul.mubr.f32.gmra.mrb[0].mxu0 %v374
    %v466 = vpop.f32.mrb[0].mxu0
    %v467 = vadd.f32 0.0, %v466
    %v468 = vpop.f32.mrb[0].mxu0
    %469 = vdwg.mxu0
    %v471 = vsel %vm178, %v21, 0
    %v474 = vsel %vm178, %v58, 0
    %v477 = vsel %vm178, %v59, 0
    %v480 = vsel %vm178, %v60, 0
    %v483 = vsel %vm178, %v61, 0
    %v486 = vsel %vm178, %v62, 0
    %v489 = vsel %vm178, %v63, 0
    %v492 = vsel %vm178, %v64, 0
    %v495 = vsel %vm178, %v65, 0
    %497 = vmatprep.subr.mxu0 0.0
    %498 = vmatpush1.xpose.msra.mxu0 %v474
    %499 = vmatprep.subr.mxu0 0.0
    %500 = vmatpush1.xpose.msra.mxu0 %v477
    %501 = vmatprep.subr.mxu0 0.0
    %502 = vmatpush1.xpose.msra.mxu0 %v480
    %503 = vmatprep.subr.mxu0 0.0
    %504 = vmatpush1.xpose.msra.mxu0 %v483
    %505 = vmatprep.subr.mxu0 0.0
    %506 = vmatpush1.xpose.msra.mxu0 %v486
    %507 = vmatprep.subr.mxu0 0.0
    %508 = vmatpush1.xpose.msra.mxu0 %v489
    %509 = vmatprep.subr.mxu0 0.0
    %510 = vmatpush1.xpose.msra.mxu0 %v492
    %511 = vmatprep.subr.mxu0 0.0
    %512 = vmatpush1.xpose.msra.mxu0 %v495
    %513 = vmatprep.subr.mxu0 0.0
    %514 = vmatpush1.xpose.msra.mxu0 0.0
    %515 = vmatprep.subr.mxu0 0.0
    %516 = vmatpush1.xpose.msra.mxu0 0.0
    %517 = vmatprep.subr.mxu0 0.0
    %518 = vmatpush1.xpose.msra.mxu0 0.0
    %519 = vmatprep.subr.mxu0 0.0
    %520 = vmatpush1.xpose.msra.mxu0 0.0
    %521 = vmatprep.subr.mxu0 0.0
    %522 = vmatpush1.xpose.msra.mxu0 0.0
    %523 = vmatprep.subr.mxu0 0.0
    %524 = vmatpush1.xpose.msra.mxu0 0.0
    %525 = vmatprep.subr.mxu0 0.0
    %526 = vmatpush1.xpose.msra.mxu0 0.0
    %527 = vmatprep.subr.mxu0 0.0
    %528 = vmatpush1.xpose.msra.mxu0 0.0
    %529 = vmatprep.subr.mxu0 0.0
    %530 = vmatpush1.xpose.msra.mxu0 0.0
    %531 = vmatprep.subr.mxu0 0.0
    %532 = vmatpush1.xpose.msra.mxu0 0.0
    %533 = vmatprep.subr.mxu0 0.0
    %534 = vmatpush1.xpose.msra.mxu0 0.0
    %535 = vmatprep.subr.mxu0 0.0
    %536 = vmatpush1.xpose.msra.mxu0 0.0
    %537 = vmatprep.subr.mxu0 0.0
    %538 = vmatpush1.xpose.msra.mxu0 0.0
    %539 = vmatprep.subr.mxu0 0.0
    %540 = vmatpush1.xpose.msra.mxu0 0.0
    %541 = vmatprep.subr.mxu0 0.0
    %542 = vmatpush1.xpose.msra.mxu0 0.0
    %543 = vmatprep.subr.mxu0 0.0
    %544 = vmatpush1.xpose.msra.mxu0 0.0
    %545 = vmatprep.subr.mxu0 0.0
    %546 = vmatpush1.xpose.msra.mxu0 0.0
    %547 = vmatprep.subr.mxu0 0.0
    %548 = vmatpush1.xpose.msra.mxu0 0.0
    %549 = vmatprep.subr.mxu0 0.0
    %550 = vmatpush1.xpose.msra.mxu0 0.0
    %551 = vmatprep.subr.mxu0 0.0
    %552 = vmatpush1.xpose.msra.mxu0 0.0
    %553 = vmatprep.subr.mxu0 0.0
    %554 = vmatpush1.xpose.msra.mxu0 0.0
    %555 = vmatprep.subr.mxu0 0.0
    %556 = vmatpush1.xpose.msra.mxu0 0.0
    %557 = vmatprep.subr.mxu0 0.0
    %558 = vmatpush1.xpose.msra.mxu0 0.0
    %559 = vmatprep.subr.mxu0 0.0
    %560 = vmatpush1.xpose.msra.mxu0 0.0
    %561 = vmatprep.mubr.f32.mxu0 0.0
    %562 = vmatmul.mubr.f32.gmra.mrb[0].mxu0 %v471
    %v563 = vpop.f32.mrb[0].mxu0
    %v564 = vadd.f32 0.0, %v563
    %v565 = vpop.f32.mrb[0].mxu0
    %566 = vdwg.mxu0
    %v568 = vsel %vm178, %v22, 0
    %v571 = vsel %vm178, %v66, 0
    %v574 = vsel %vm178, %v67, 0
    %v577 = vsel %vm178, %v68, 0
    %v580 = vsel %vm178, %v69, 0
    %v583 = vsel %vm178, %v70, 0
    %v586 = vsel %vm178, %v71, 0
    %v589 = vsel %vm178, %v72, 0
    %v592 = vsel %vm178, %v73, 0
    %594 = vmatprep.subr.mxu0 0.0
    %595 = vmatpush1.xpose.msra.mxu0 %v571
    %596 = vmatprep.subr.mxu0 0.0
    %597 = vmatpush1.xpose.msra.mxu0 %v574
    %598 = vmatprep.subr.mxu0 0.0
    %599 = vmatpush1.xpose.msra.mxu0 %v577
    %600 = vmatprep.subr.mxu0 0.0
    %601 = vmatpush1.xpose.msra.mxu0 %v580
    %602 = vmatprep.subr.mxu0 0.0
    %603 = vmatpush1.xpose.msra.mxu0 %v583
    %604 = vmatprep.subr.mxu0 0.0
    %605 = vmatpush1.xpose.msra.mxu0 %v586
    %606 = vmatprep.subr.mxu0 0.0
    %607 = vmatpush1.xpose.msra.mxu0 %v589
    %608 = vmatprep.subr.mxu0 0.0
    %609 = vmatpush1.xpose.msra.mxu0 %v592
    %610 = vmatprep.subr.mxu0 0.0
    %611 = vmatpush1.xpose.msra.mxu0 0.0
    %612 = vmatprep.subr.mxu0 0.0
    %613 = vmatpush1.xpose.msra.mxu0 0.0
    %614 = vmatprep.subr.mxu0 0.0
    %615 = vmatpush1.xpose.msra.mxu0 0.0
    %616 = vmatprep.subr.mxu0 0.0
    %617 = vmatpush1.xpose.msra.mxu0 0.0
    %618 = vmatprep.subr.mxu0 0.0
    %619 = vmatpush1.xpose.msra.mxu0 0.0
    %620 = vmatprep.subr.mxu0 0.0
    %621 = vmatpush1.xpose.msra.mxu0 0.0
    %622 = vmatprep.subr.mxu0 0.0
    %623 = vmatpush1.xpose.msra.mxu0 0.0
    %624 = vmatprep.subr.mxu0 0.0
    %625 = vmatpush1.xpose.msra.mxu0 0.0
    %626 = vmatprep.subr.mxu0 0.0
    %627 = vmatpush1.xpose.msra.mxu0 0.0
    %628 = vmatprep.subr.mxu0 0.0
    %629 = vmatpush1.xpose.msra.mxu0 0.0
    %630 = vmatprep.subr.mxu0 0.0
    %631 = vmatpush1.xpose.msra.mxu0 0.0
    %632 = vmatprep.subr.mxu0 0.0
    %633 = vmatpush1.xpose.msra.mxu0 0.0
    %634 = vmatprep.subr.mxu0 0.0
    %635 = vmatpush1.xpose.msra.mxu0 0.0
    %636 = vmatprep.subr.mxu0 0.0
    %637 = vmatpush1.xpose.msra.mxu0 0.0
    %638 = vmatprep.subr.mxu0 0.0
    %639 = vmatpush1.xpose.msra.mxu0 0.0
    %640 = vmatprep.subr.mxu0 0.0
    %641 = vmatpush1.xpose.msra.mxu0 0.0
    %642 = vmatprep.subr.mxu0 0.0
    %643 = vmatpush1.xpose.msra.mxu0 0.0
    %644 = vmatprep.subr.mxu0 0.0
    %645 = vmatpush1.xpose.msra.mxu0 0.0
    %646 = vmatprep.subr.mxu0 0.0
    %647 = vmatpush1.xpose.msra.mxu0 0.0
    %648 = vmatprep.subr.mxu0 0.0
    %649 = vmatpush1.xpose.msra.mxu0 0.0
    %650 = vmatprep.subr.mxu0 0.0
    %651 = vmatpush1.xpose.msra.mxu0 0.0
    %652 = vmatprep.subr.mxu0 0.0
    %653 = vmatpush1.xpose.msra.mxu0 0.0
    %654 = vmatprep.subr.mxu0 0.0
    %655 = vmatpush1.xpose.msra.mxu0 0.0
    %656 = vmatprep.subr.mxu0 0.0
    %657 = vmatpush1.xpose.msra.mxu0 0.0
    %658 = vmatprep.mubr.f32.mxu0 0.0
    %659 = vmatmul.mubr.f32.gmra.mrb[0].mxu0 %v568
    %v660 = vpop.f32.mrb[0].mxu0
    %v661 = vadd.f32 0.0, %v660
    %v662 = vpop.f32.mrb[0].mxu0
    %663 = vdwg.mxu0
    %v665 = vsel %vm178, %v23, 0
    %v668 = vsel %vm178, %v74, 0
    %v671 = vsel %vm178, %v75, 0
    %v674 = vsel %vm178, %v76, 0
    %v677 = vsel %vm178, %v77, 0
    %v680 = vsel %vm178, %v78, 0
    %v683 = vsel %vm178, %v79, 0
    %v686 = vsel %vm178, %v80, 0
    %v689 = vsel %vm178, %v81, 0
    %691 = vmatprep.subr.mxu0 0.0
    %692 = vmatpush1.xpose.msra.mxu0 %v668
    %693 = vmatprep.subr.mxu0 0.0
    %694 = vmatpush1.xpose.msra.mxu0 %v671
    %695 = vmatprep.subr.mxu0 0.0
    %696 = vmatpush1.xpose.msra.mxu0 %v674
    %697 = vmatprep.subr.mxu0 0.0
    %698 = vmatpush1.xpose.msra.mxu0 %v677
    %699 = vmatprep.subr.mxu0 0.0
    %700 = vmatpush1.xpose.msra.mxu0 %v680
    %701 = vmatprep.subr.mxu0 0.0
    %702 = vmatpush1.xpose.msra.mxu0 %v683
    %703 = vmatprep.subr.mxu0 0.0
    %704 = vmatpush1.xpose.msra.mxu0 %v686
    %705 = vmatprep.subr.mxu0 0.0
    %706 = vmatpush1.xpose.msra.mxu0 %v689
    %707 = vmatprep.subr.mxu0 0.0
    %708 = vmatpush1.xpose.msra.mxu0 0.0
    %709 = vmatprep.subr.mxu0 0.0
    %710 = vmatpush1.xpose.msra.mxu0 0.0
    %711 = vmatprep.subr.mxu0 0.0
    %712 = vmatpush1.xpose.msra.mxu0 0.0
    %713 = vmatprep.subr.mxu0 0.0
    %714 = vmatpush1.xpose.msra.mxu0 0.0
    %715 = vmatprep.subr.mxu0 0.0
    %716 = vmatpush1.xpose.msra.mxu0 0.0
    %717 = vmatprep.subr.mxu0 0.0
    %718 = vmatpush1.xpose.msra.mxu0 0.0
    %719 = vmatprep.subr.mxu0 0.0
    %720 = vmatpush1.xpose.msra.mxu0 0.0
    %721 = vmatprep.subr.mxu0 0.0
    %722 = vmatpush1.xpose.msra.mxu0 0.0
    %723 = vmatprep.subr.mxu0 0.0
    %724 = vmatpush1.xpose.msra.mxu0 0.0
    %725 = vmatprep.subr.mxu0 0.0
    %726 = vmatpush1.xpose.msra.mxu0 0.0
    %727 = vmatprep.subr.mxu0 0.0
    %728 = vmatpush1.xpose.msra.mxu0 0.0
    %729 = vmatprep.subr.mxu0 0.0
    %730 = vmatpush1.xpose.msra.mxu0 0.0
    %731 = vmatprep.subr.mxu0 0.0
    %732 = vmatpush1.xpose.msra.mxu0 0.0
    %733 = vmatprep.subr.mxu0 0.0
    %734 = vmatpush1.xpose.msra.mxu0 0.0
    %735 = vmatprep.subr.mxu0 0.0
    %736 = vmatpush1.xpose.msra.mxu0 0.0
    %737 = vmatprep.subr.mxu0 0.0
    %738 = vmatpush1.xpose.msra.mxu0 0.0
    %739 = vmatprep.subr.mxu0 0.0
    %740 = vmatpush1.xpose.msra.mxu0 0.0
    %741 = vmatprep.subr.mxu0 0.0
    %742 = vmatpush1.xpose.msra.mxu0 0.0
    %743 = vmatprep.subr.mxu0 0.0
    %744 = vmatpush1.xpose.msra.mxu0 0.0
    %745 = vmatprep.subr.mxu0 0.0
    %746 = vmatpush1.xpose.msra.mxu0 0.0
    %747 = vmatprep.subr.mxu0 0.0
    %748 = vmatpush1.xpose.msra.mxu0 0.0
    %749 = vmatprep.subr.mxu0 0.0
    %750 = vmatpush1.xpose.msra.mxu0 0.0
    %751 = vmatprep.subr.mxu0 0.0
    %752 = vmatpush1.xpose.msra.mxu0 0.0
    %753 = vmatprep.subr.mxu0 0.0
    %754 = vmatpush1.xpose.msra.mxu0 0.0
    %755 = vmatprep.mubr.f32.mxu0 0.0
    %756 = vmatmul.mubr.f32.gmra.mrb[0].mxu0 %v665
    %v757 = vpop.f32.mrb[0].mxu0
    %v758 = vadd.f32 0.0, %v757
    %v759 = vpop.f32.mrb[0].mxu0
    %760 = vdwg.mxu0
    %v762 = vsel %vm178, %v24, 0
    %v765 = vsel %vm178, %v82, 0
    %v768 = vsel %vm178, %v83, 0
    %v771 = vsel %vm178, %v84, 0
    %v774 = vsel %vm178, %v85, 0
    %v777 = vsel %vm178, %v86, 0
    %v780 = vsel %vm178, %v87, 0
    %v783 = vsel %vm178, %v88, 0
    %v786 = vsel %vm178, %v89, 0
    %788 = vmatprep.subr.mxu0 0.0
    %789 = vmatpush1.xpose.msra.mxu0 %v765
    %790 = vmatprep.subr.mxu0 0.0
    %791 = vmatpush1.xpose.msra.mxu0 %v768
    %792 = vmatprep.subr.mxu0 0.0
    %793 = vmatpush1.xpose.msra.mxu0 %v771
    %794 = vmatprep.subr.mxu0 0.0
    %795 = vmatpush1.xpose.msra.mxu0 %v774
    %796 = vmatprep.subr.mxu0 0.0
    %797 = vmatpush1.xpose.msra.mxu0 %v777
    %798 = vmatprep.subr.mxu0 0.0
    %799 = vmatpush1.xpose.msra.mxu0 %v780
    %800 = vmatprep.subr.mxu0 0.0
    %801 = vmatpush1.xpose.msra.mxu0 %v783
    %802 = vmatprep.subr.mxu0 0.0
    %803 = vmatpush1.xpose.msra.mxu0 %v786
    %804 = vmatprep.subr.mxu0 0.0
    %805 = vmatpush1.xpose.msra.mxu0 0.0
    %806 = vmatprep.subr.mxu0 0.0
    %807 = vmatpush1.xpose.msra.mxu0 0.0
    %808 = vmatprep.subr.mxu0 0.0
    %809 = vmatpush1.xpose.msra.mxu0 0.0
    %810 = vmatprep.subr.mxu0 0.0
    %811 = vmatpush1.xpose.msra.mxu0 0.0
    %812 = vmatprep.subr.mxu0 0.0
    %813 = vmatpush1.xpose.msra.mxu0 0.0
    %814 = vmatprep.subr.mxu0 0.0
    %815 = vmatpush1.xpose.msra.mxu0 0.0
    %816 = vmatprep.subr.mxu0 0.0
    %817 = vmatpush1.xpose.msra.mxu0 0.0
    %818 = vmatprep.subr.mxu0 0.0
    %819 = vmatpush1.xpose.msra.mxu0 0.0
    %820 = vmatprep.subr.mxu0 0.0
    %821 = vmatpush1.xpose.msra.mxu0 0.0
    %822 = vmatprep.subr.mxu0 0.0
    %823 = vmatpush1.xpose.msra.mxu0 0.0
    %824 = vmatprep.subr.mxu0 0.0
    %825 = vmatpush1.xpose.msra.mxu0 0.0
    %826 = vmatprep.subr.mxu0 0.0
    %827 = vmatpush1.xpose.msra.mxu0 0.0
    %828 = vmatprep.subr.mxu0 0.0
    %829 = vmatpush1.xpose.msra.mxu0 0.0
    %830 = vmatprep.subr.mxu0 0.0
    %831 = vmatpush1.xpose.msra.mxu0 0.0
    %832 = vmatprep.subr.mxu0 0.0
    %833 = vmatpush1.xpose.msra.mxu0 0.0
    %834 = vmatprep.subr.mxu0 0.0
    %835 = vmatpush1.xpose.msra.mxu0 0.0
    %836 = vmatprep.subr.mxu0 0.0
    %837 = vmatpush1.xpose.msra.mxu0 0.0
    %838 = vmatprep.subr.mxu0 0.0
    %839 = vmatpush1.xpose.msra.mxu0 0.0
    %840 = vmatprep.subr.mxu0 0.0
    %841 = vmatpush1.xpose.msra.mxu0 0.0
    %842 = vmatprep.subr.mxu0 0.0
    %843 = vmatpush1.xpose.msra.mxu0 0.0
    %844 = vmatprep.subr.mxu0 0.0
    %845 = vmatpush1.xpose.msra.mxu0 0.0
    %846 = vmatprep.subr.mxu0 0.0
    %847 = vmatpush1.xpose.msra.mxu0 0.0
    %848 = vmatprep.subr.mxu0 0.0
    %849 = vmatpush1.xpose.msra.mxu0 0.0
    %850 = vmatprep.subr.mxu0 0.0
    %851 = vmatpush1.xpose.msra.mxu0 0.0
    %852 = vmatprep.mubr.f32.mxu0 0.0
    %853 = vmatmul.mubr.f32.gmra.mrb[0].mxu0 %v762
    %v854 = vpop.f32.mrb[0].mxu0
    %v855 = vadd.f32 0.0, %v854
    %v856 = vpop.f32.mrb[0].mxu0
    %857 = vdwg.mxu0
    %v859 = vsel %vm178, %v25, 0
    %v862 = vsel %vm178, %v90, 0
    %v865 = vsel %vm178, %v91, 0
    %v868 = vsel %vm178, %v92, 0
    %v871 = vsel %vm178, %v93, 0
    %v874 = vsel %vm178, %v94, 0
    %v877 = vsel %vm178, %v95, 0
    %v880 = vsel %vm178, %v96, 0
    %v883 = vsel %vm178, %v97, 0
    %885 = vmatprep.subr.mxu0 0.0
    %886 = vmatpush1.xpose.msra.mxu0 %v862
    %887 = vmatprep.subr.mxu0 0.0
    %888 = vmatpush1.xpose.msra.mxu0 %v865
    %889 = vmatprep.subr.mxu0 0.0
    %890 = vmatpush1.xpose.msra.mxu0 %v868
    %891 = vmatprep.subr.mxu0 0.0
    %892 = vmatpush1.xpose.msra.mxu0 %v871
    %893 = vmatprep.subr.mxu0 0.0
    %894 = vmatpush1.xpose.msra.mxu0 %v874
    %895 = vmatprep.subr.mxu0 0.0
    %896 = vmatpush1.xpose.msra.mxu0 %v877
    %897 = vmatprep.subr.mxu0 0.0
    %898 = vmatpush1.xpose.msra.mxu0 %v880
    %899 = vmatprep.subr.mxu0 0.0
    %900 = vmatpush1.xpose.msra.mxu0 %v883
    %901 = vmatprep.subr.mxu0 0.0
    %902 = vmatpush1.xpose.msra.mxu0 0.0
    %903 = vmatprep.subr.mxu0 0.0
    %904 = vmatpush1.xpose.msra.mxu0 0.0
    %905 = vmatprep.subr.mxu0 0.0
    %906 = vmatpush1.xpose.msra.mxu0 0.0
    %907 = vmatprep.subr.mxu0 0.0
    %908 = vmatpush1.xpose.msra.mxu0 0.0
    %909 = vmatprep.subr.mxu0 0.0
    %910 = vmatpush1.xpose.msra.mxu0 0.0
    %911 = vmatprep.subr.mxu0 0.0
    %912 = vmatpush1.xpose.msra.mxu0 0.0
    %913 = vmatprep.subr.mxu0 0.0
    %914 = vmatpush1.xpose.msra.mxu0 0.0
    %915 = vmatprep.subr.mxu0 0.0
    %916 = vmatpush1.xpose.msra.mxu0 0.0
    %917 = vmatprep.subr.mxu0 0.0
    %918 = vmatpush1.xpose.msra.mxu0 0.0
    %919 = vmatprep.subr.mxu0 0.0
    %920 = vmatpush1.xpose.msra.mxu0 0.0
    %921 = vmatprep.subr.mxu0 0.0
    %922 = vmatpush1.xpose.msra.mxu0 0.0
    %923 = vmatprep.subr.mxu0 0.0
    %924 = vmatpush1.xpose.msra.mxu0 0.0
    %925 = vmatprep.subr.mxu0 0.0
    %926 = vmatpush1.xpose.msra.mxu0 0.0
    %927 = vmatprep.subr.mxu0 0.0
    %928 = vmatpush1.xpose.msra.mxu0 0.0
    %929 = vmatprep.subr.mxu0 0.0
    %930 = vmatpush1.xpose.msra.mxu0 0.0
    %931 = vmatprep.subr.mxu0 0.0
    %932 = vmatpush1.xpose.msra.mxu0 0.0
    %933 = vmatprep.subr.mxu0 0.0
    %934 = vmatpush1.xpose.msra.mxu0 0.0
    %935 = vmatprep.subr.mxu0 0.0
    %936 = vmatpush1.xpose.msra.mxu0 0.0
    %937 = vmatprep.subr.mxu0 0.0
    %938 = vmatpush1.xpose.msra.mxu0 0.0
    %939 = vmatprep.subr.mxu0 0.0
    %940 = vmatpush1.xpose.msra.mxu0 0.0
    %941 = vmatprep.subr.mxu0 0.0
    %942 = vmatpush1.xpose.msra.mxu0 0.0
    %943 = vmatprep.subr.mxu0 0.0
    %944 = vmatpush1.xpose.msra.mxu0 0.0
    %945 = vmatprep.subr.mxu0 0.0
    %946 = vmatpush1.xpose.msra.mxu0 0.0
    %947 = vmatprep.subr.mxu0 0.0
    %948 = vmatpush1.xpose.msra.mxu0 0.0
    %949 = vmatprep.mubr.f32.mxu0 0.0
    %950 = vmatmul.mubr.f32.gmra.mrb[0].mxu0 %v859
    %v951 = vpop.f32.mrb[0].mxu0
    %v952 = vadd.f32 0.0, %v951
    %v953 = vpop.f32.mrb[0].mxu0
    %954 = vdwg.mxu0
    %v956 = vsel %vm178, %v26, 0
    %v959 = vsel %vm178, %v98, 0
    %v962 = vsel %vm178, %v99, 0
    %v965 = vsel %vm178, %v100, 0
    %v968 = vsel %vm178, %v101, 0
    %v971 = vsel %vm178, %v102, 0
    %v974 = vsel %vm178, %v103, 0
    %v977 = vsel %vm178, %v104, 0
    %v980 = vsel %vm178, %v105, 0
    %982 = vmatprep.subr.mxu0 0.0
    %983 = vmatpush1.xpose.msra.mxu0 %v959
    %984 = vmatprep.subr.mxu0 0.0
    %985 = vmatpush1.xpose.msra.mxu0 %v962
    %986 = vmatprep.subr.mxu0 0.0
    %987 = vmatpush1.xpose.msra.mxu0 %v965
    %988 = vmatprep.subr.mxu0 0.0
    %989 = vmatpush1.xpose.msra.mxu0 %v968
    %990 = vmatprep.subr.mxu0 0.0
    %991 = vmatpush1.xpose.msra.mxu0 %v971
    %992 = vmatprep.subr.mxu0 0.0
    %993 = vmatpush1.xpose.msra.mxu0 %v974
    %994 = vmatprep.subr.mxu0 0.0
    %995 = vmatpush1.xpose.msra.mxu0 %v977
    %996 = vmatprep.subr.mxu0 0.0
    %997 = vmatpush1.xpose.msra.mxu0 %v980
    %998 = vmatprep.subr.mxu0 0.0
    %999 = vmatpush1.xpose.msra.mxu0 0.0
    %1000 = vmatprep.subr.mxu0 0.0
    %1001 = vmatpush1.xpose.msra.mxu0 0.0
    %1002 = vmatprep.subr.mxu0 0.0
    %1003 = vmatpush1.xpose.msra.mxu0 0.0
    %1004 = vmatprep.subr.mxu0 0.0
    %1005 = vmatpush1.xpose.msra.mxu0 0.0
    %1006 = vmatprep.subr.mxu0 0.0
    %1007 = vmatpush1.xpose.msra.mxu0 0.0
    %1008 = vmatprep.subr.mxu0 0.0
    %1009 = vmatpush1.xpose.msra.mxu0 0.0
    %1010 = vmatprep.subr.mxu0 0.0
    %1011 = vmatpush1.xpose.msra.mxu0 0.0
    %1012 = vmatprep.subr.mxu0 0.0
    %1013 = vmatpush1.xpose.msra.mxu0 0.0
    %1014 = vmatprep.subr.mxu0 0.0
    %1015 = vmatpush1.xpose.msra.mxu0 0.0
    %1016 = vmatprep.subr.mxu0 0.0
    %1017 = vmatpush1.xpose.msra.mxu0 0.0
    %1018 = vmatprep.subr.mxu0 0.0
    %1019 = vmatpush1.xpose.msra.mxu0 0.0
    %1020 = vmatprep.subr.mxu0 0.0
    %1021 = vmatpush1.xpose.msra.mxu0 0.0
    %1022 = vmatprep.subr.mxu0 0.0
    %1023 = vmatpush1.xpose.msra.mxu0 0.0
    %1024 = vmatprep.subr.mxu0 0.0
    %1025 = vmatpush1.xpose.msra.mxu0 0.0
    %1026 = vmatprep.subr.mxu0 0.0
    %1027 = vmatpush1.xpose.msra.mxu0 0.0
    %1028 = vmatprep.subr.mxu0 0.0
    %1029 = vmatpush1.xpose.msra.mxu0 0.0
    %1030 = vmatprep.subr.mxu0 0.0
    %1031 = vmatpush1.xpose.msra.mxu0 0.0
    %1032 = vmatprep.subr.mxu0 0.0
    %1033 = vmatpush1.xpose.msra.mxu0 0.0
    %1034 = vmatprep.subr.mxu0 0.0
    %1035 = vmatpush1.xpose.msra.mxu0 0.0
    %1036 = vmatprep.subr.mxu0 0.0
    %1037 = vmatpush1.xpose.msra.mxu0 0.0
    %1038 = vmatprep.subr.mxu0 0.0
    %1039 = vmatpush1.xpose.msra.mxu0 0.0
    %1040 = vmatprep.subr.mxu0 0.0
    %1041 = vmatpush1.xpose.msra.mxu0 0.0
    %1042 = vmatprep.subr.mxu0 0.0
    %1043 = vmatpush1.xpose.msra.mxu0 0.0
    %1044 = vmatprep.subr.mxu0 0.0
    %1045 = vmatpush1.xpose.msra.mxu0 0.0
    %1046 = vmatprep.mubr.f32.mxu0 0.0
    %1047 = vmatmul.mubr.f32.gmra.mrb[0].mxu0 %v956
    %v1048 = vpop.f32.mrb[0].mxu0
    %v1049 = vadd.f32 0.0, %v1048
    %v1050 = vpop.f32.mrb[0].mxu0
    %1051 = vdwg.mxu0
    %v1053 = vsel %vm178, %v27, 0
    %v1056 = vsel %vm178, %v106, 0
    %v1059 = vsel %vm178, %v107, 0
    %v1062 = vsel %vm178, %v108, 0
    %v1065 = vsel %vm178, %v109, 0
    %v1068 = vsel %vm178, %v110, 0
    %v1071 = vsel %vm178, %v111, 0
    %v1074 = vsel %vm178, %v112, 0
    %v1077 = vsel %vm178, %v113, 0
    %1079 = vmatprep.subr.mxu0 0.0
    %1080 = vmatpush1.xpose.msra.mxu0 %v1056
    %1081 = vmatprep.subr.mxu0 0.0
    %1082 = vmatpush1.xpose.msra.mxu0 %v1059
    %1083 = vmatprep.subr.mxu0 0.0
    %1084 = vmatpush1.xpose.msra.mxu0 %v1062
    %1085 = vmatprep.subr.mxu0 0.0
    %1086 = vmatpush1.xpose.msra.mxu0 %v1065
    %1087 = vmatprep.subr.mxu0 0.0
    %1088 = vmatpush1.xpose.msra.mxu0 %v1068
    %1089 = vmatprep.subr.mxu0 0.0
    %1090 = vmatpush1.xpose.msra.mxu0 %v1071
    %1091 = vmatprep.subr.mxu0 0.0
    %1092 = vmatpush1.xpose.msra.mxu0 %v1074
    %1093 = vmatprep.subr.mxu0 0.0
    %1094 = vmatpush1.xpose.msra.mxu0 %v1077
    %1095 = vmatprep.subr.mxu0 0.0
    %1096 = vmatpush1.xpose.msra.mxu0 0.0
    %1097 = vmatprep.subr.mxu0 0.0
    %1098 = vmatpush1.xpose.msra.mxu0 0.0
    %1099 = vmatprep.subr.mxu0 0.0
    %1100 = vmatpush1.xpose.msra.mxu0 0.0
    %1101 = vmatprep.subr.mxu0 0.0
    %1102 = vmatpush1.xpose.msra.mxu0 0.0
    %1103 = vmatprep.subr.mxu0 0.0
    %1104 = vmatpush1.xpose.msra.mxu0 0.0
    %1105 = vmatprep.subr.mxu0 0.0
    %1106 = vmatpush1.xpose.msra.mxu0 0.0
    %1107 = vmatprep.subr.mxu0 0.0
    %1108 = vmatpush1.xpose.msra.mxu0 0.0
    %1109 = vmatprep.subr.mxu0 0.0
    %1110 = vmatpush1.xpose.msra.mxu0 0.0
    %1111 = vmatprep.subr.mxu0 0.0
    %1112 = vmatpush1.xpose.msra.mxu0 0.0
    %1113 = vmatprep.subr.mxu0 0.0
    %1114 = vmatpush1.xpose.msra.mxu0 0.0
    %1115 = vmatprep.subr.mxu0 0.0
    %1116 = vmatpush1.xpose.msra.mxu0 0.0
    %1117 = vmatprep.subr.mxu0 0.0
    %1118 = vmatpush1.xpose.msra.mxu0 0.0
    %1119 = vmatprep.subr.mxu0 0.0
    %1120 = vmatpush1.xpose.msra.mxu0 0.0
    %1121 = vmatprep.subr.mxu0 0.0
    %1122 = vmatpush1.xpose.msra.mxu0 0.0
    %1123 = vmatprep.subr.mxu0 0.0
    %1124 = vmatpush1.xpose.msra.mxu0 0.0
    %1125 = vmatprep.subr.mxu0 0.0
    %1126 = vmatpush1.xpose.msra.mxu0 0.0
    %1127 = vmatprep.subr.mxu0 0.0
    %1128 = vmatpush1.xpose.msra.mxu0 0.0
    %1129 = vmatprep.subr.mxu0 0.0
    %1130 = vmatpush1.xpose.msra.mxu0 0.0
    %1131 = vmatprep.subr.mxu0 0.0
    %1132 = vmatpush1.xpose.msra.mxu0 0.0
    %1133 = vmatprep.subr.mxu0 0.0
    %1134 = vmatpush1.xpose.msra.mxu0 0.0
    %1135 = vmatprep.subr.mxu0 0.0
    %1136 = vmatpush1.xpose.msra.mxu0 0.0
    %1137 = vmatprep.subr.mxu0 0.0
    %1138 = vmatpush1.xpose.msra.mxu0 0.0
    %1139 = vmatprep.subr.mxu0 0.0
    %1140 = vmatpush1.xpose.msra.mxu0 0.0
    %1141 = vmatprep.subr.mxu0 0.0
    %1142 = vmatpush1.xpose.msra.mxu0 0.0
    %1143 = vmatprep.mubr.f32.mxu0 0.0
    %1144 = vmatmul.mubr.f32.gmra.mrb[0].mxu0 %v1053
    %v1145 = vpop.f32.mrb[0].mxu0
    %v1146 = vadd.f32 0.0, %v1145
    %v1147 = vpop.f32.mrb[0].mxu0
    %1148 = vdwg.mxu0
    %v1150 = vsel %vm178, %v28, 0
    %v1153 = vsel %vm178, %v114, 0
    %v1156 = vsel %vm178, %v115, 0
    %v1159 = vsel %vm178, %v116, 0
    %v1162 = vsel %vm178, %v117, 0
    %v1165 = vsel %vm178, %v118, 0
    %v1168 = vsel %vm178, %v119, 0
    %v1171 = vsel %vm178, %v120, 0
    %v1174 = vsel %vm178, %v121, 0
    %1176 = vmatprep.subr.mxu0 0.0
    %1177 = vmatpush1.xpose.msra.mxu0 %v1153
    %1178 = vmatprep.subr.mxu0 0.0
    %1179 = vmatpush1.xpose.msra.mxu0 %v1156
    %1180 = vmatprep.subr.mxu0 0.0
    %1181 = vmatpush1.xpose.msra.mxu0 %v1159
    %1182 = vmatprep.subr.mxu0 0.0
    %1183 = vmatpush1.xpose.msra.mxu0 %v1162
    %1184 = vmatprep.subr.mxu0 0.0
    %1185 = vmatpush1.xpose.msra.mxu0 %v1165
    %1186 = vmatprep.subr.mxu0 0.0
    %1187 = vmatpush1.xpose.msra.mxu0 %v1168
    %1188 = vmatprep.subr.mxu0 0.0
    %1189 = vmatpush1.xpose.msra.mxu0 %v1171
    %1190 = vmatprep.subr.mxu0 0.0
    %1191 = vmatpush1.xpose.msra.mxu0 %v1174
    %1192 = vmatprep.subr.mxu0 0.0
    %1193 = vmatpush1.xpose.msra.mxu0 0.0
    %1194 = vmatprep.subr.mxu0 0.0
    %1195 = vmatpush1.xpose.msra.mxu0 0.0
    %1196 = vmatprep.subr.mxu0 0.0
    %1197 = vmatpush1.xpose.msra.mxu0 0.0
    %1198 = vmatprep.subr.mxu0 0.0
    %1199 = vmatpush1.xpose.msra.mxu0 0.0
    %1200 = vmatprep.subr.mxu0 0.0
    %1201 = vmatpush1.xpose.msra.mxu0 0.0
    %1202 = vmatprep.subr.mxu0 0.0
    %1203 = vmatpush1.xpose.msra.mxu0 0.0
    %1204 = vmatprep.subr.mxu0 0.0
    %1205 = vmatpush1.xpose.msra.mxu0 0.0
    %1206 = vmatprep.subr.mxu0 0.0
    %1207 = vmatpush1.xpose.msra.mxu0 0.0
    %1208 = vmatprep.subr.mxu0 0.0
    %1209 = vmatpush1.xpose.msra.mxu0 0.0
    %1210 = vmatprep.subr.mxu0 0.0
    %1211 = vmatpush1.xpose.msra.mxu0 0.0
    %1212 = vmatprep.subr.mxu0 0.0
    %1213 = vmatpush1.xpose.msra.mxu0 0.0
    %1214 = vmatprep.subr.mxu0 0.0
    %1215 = vmatpush1.xpose.msra.mxu0 0.0
    %1216 = vmatprep.subr.mxu0 0.0
    %1217 = vmatpush1.xpose.msra.mxu0 0.0
    %1218 = vmatprep.subr.mxu0 0.0
    %1219 = vmatpush1.xpose.msra.mxu0 0.0
    %1220 = vmatprep.subr.mxu0 0.0
    %1221 = vmatpush1.xpose.msra.mxu0 0.0
    %1222 = vmatprep.subr.mxu0 0.0
    %1223 = vmatpush1.xpose.msra.mxu0 0.0
    %1224 = vmatprep.subr.mxu0 0.0
    %1225 = vmatpush1.xpose.msra.mxu0 0.0
    %1226 = vmatprep.subr.mxu0 0.0
    %1227 = vmatpush1.xpose.msra.mxu0 0.0
    %1228 = vmatprep.subr.mxu0 0.0
    %1229 = vmatpush1.xpose.msra.mxu0 0.0
    %1230 = vmatprep.subr.mxu0 0.0
    %1231 = vmatpush1.xpose.msra.mxu0 0.0
    %1232 = vmatprep.subr.mxu0 0.0
    %1233 = vmatpush1.xpose.msra.mxu0 0.0
    %1234 = vmatprep.subr.mxu0 0.0
    %1235 = vmatpush1.xpose.msra.mxu0 0.0
    %1236 = vmatprep.subr.mxu0 0.0
    %1237 = vmatpush1.xpose.msra.mxu0 0.0
    %1238 = vmatprep.subr.mxu0 0.0
    %1239 = vmatpush1.xpose.msra.mxu0 0.0
    %1240 = vmatprep.mubr.f32.mxu0 0.0
    %1241 = vmatmul.mubr.f32.gmra.mrb[0].mxu0 %v1150
    %v1242 = vpop.f32.mrb[0].mxu0
    %v1243 = vadd.f32 0.0, %v1242
    %v1244 = vpop.f32.mrb[0].mxu0
    %1245 = vdwg.mxu0
    %v1247 = vsel %vm178, %v29, 0
    %v1250 = vsel %vm178, %v122, 0
    %v1253 = vsel %vm178, %v123, 0
    %v1256 = vsel %vm178, %v124, 0
    %v1259 = vsel %vm178, %v125, 0
    %v1262 = vsel %vm178, %v126, 0
    %v1265 = vsel %vm178, %v127, 0
    %v1268 = vsel %vm178, %v128, 0
    %v1271 = vsel %vm178, %v129, 0
    %1273 = vmatprep.subr.mxu0 0.0
    %1274 = vmatpush1.xpose.msra.mxu0 %v1250
    %1275 = vmatprep.subr.mxu0 0.0
    %1276 = vmatpush1.xpose.msra.mxu0 %v1253
    %1277 = vmatprep.subr.mxu0 0.0
    %1278 = vmatpush1.xpose.msra.mxu0 %v1256
    %1279 = vmatprep.subr.mxu0 0.0
    %1280 = vmatpush1.xpose.msra.mxu0 %v1259
    %1281 = vmatprep.subr.mxu0 0.0
    %1282 = vmatpush1.xpose.msra.mxu0 %v1262
    %1283 = vmatprep.subr.mxu0 0.0
    %1284 = vmatpush1.xpose.msra.mxu0 %v1265
    %1285 = vmatprep.subr.mxu0 0.0
    %1286 = vmatpush1.xpose.msra.mxu0 %v1268
    %1287 = vmatprep.subr.mxu0 0.0
    %1288 = vmatpush1.xpose.msra.mxu0 %v1271
    %1289 = vmatprep.subr.mxu0 0.0
    %1290 = vmatpush1.xpose.msra.mxu0 0.0
    %1291 = vmatprep.subr.mxu0 0.0
    %1292 = vmatpush1.xpose.msra.mxu0 0.0
    %1293 = vmatprep.subr.mxu0 0.0
    %1294 = vmatpush1.xpose.msra.mxu0 0.0
    %1295 = vmatprep.subr.mxu0 0.0
    %1296 = vmatpush1.xpose.msra.mxu0 0.0
    %1297 = vmatprep.subr.mxu0 0.0
    %1298 = vmatpush1.xpose.msra.mxu0 0.0
    %1299 = vmatprep.subr.mxu0 0.0
    %1300 = vmatpush1.xpose.msra.mxu0 0.0
    %1301 = vmatprep.subr.mxu0 0.0
    %1302 = vmatpush1.xpose.msra.mxu0 0.0
    %1303 = vmatprep.subr.mxu0 0.0
    %1304 = vmatpush1.xpose.msra.mxu0 0.0
    %1305 = vmatprep.subr.mxu0 0.0
    %1306 = vmatpush1.xpose.msra.mxu0 0.0
    %1307 = vmatprep.subr.mxu0 0.0
    %1308 = vmatpush1.xpose.msra.mxu0 0.0
    %1309 = vmatprep.subr.mxu0 0.0
    %1310 = vmatpush1.xpose.msra.mxu0 0.0
    %1311 = vmatprep.subr.mxu0 0.0
    %1312 = vmatpush1.xpose.msra.mxu0 0.0
    %1313 = vmatprep.subr.mxu0 0.0
    %1314 = vmatpush1.xpose.msra.mxu0 0.0
    %1315 = vmatprep.subr.mxu0 0.0
    %1316 = vmatpush1.xpose.msra.mxu0 0.0
    %1317 = vmatprep.subr.mxu0 0.0
    %1318 = vmatpush1.xpose.msra.mxu0 0.0
    %1319 = vmatprep.subr.mxu0 0.0
    %1320 = vmatpush1.xpose.msra.mxu0 0.0
    %1321 = vmatprep.subr.mxu0 0.0
    %1322 = vmatpush1.xpose.msra.mxu0 0.0
    %1323 = vmatprep.subr.mxu0 0.0
    %1324 = vmatpush1.xpose.msra.mxu0 0.0
    %1325 = vmatprep.subr.mxu0 0.0
    %1326 = vmatpush1.xpose.msra.mxu0 0.0
    %1327 = vmatprep.subr.mxu0 0.0
    %1328 = vmatpush1.xpose.msra.mxu0 0.0
    %1329 = vmatprep.subr.mxu0 0.0
    %1330 = vmatpush1.xpose.msra.mxu0 0.0
    %1331 = vmatprep.subr.mxu0 0.0
    %1332 = vmatpush1.xpose.msra.mxu0 0.0
    %1333 = vmatprep.subr.mxu0 0.0
    %1334 = vmatpush1.xpose.msra.mxu0 0.0
    %1335 = vmatprep.subr.mxu0 0.0
    %1336 = vmatpush1.xpose.msra.mxu0 0.0
    %1337 = vmatprep.mubr.f32.mxu0 0.0
    %1338 = vmatmul.mubr.f32.gmra.mrb[0].mxu0 %v1247
    %v1339 = vpop.f32.mrb[0].mxu0
    %v1340 = vadd.f32 0.0, %v1339
    %v1341 = vpop.f32.mrb[0].mxu0
    %1342 = vdwg.mxu0
    %v1344 = vsel %vm178, %v30, 0
    %v1347 = vsel %vm178, %v130, 0
    %v1350 = vsel %vm178, %v131, 0
    %v1353 = vsel %vm178, %v132, 0
    %v1356 = vsel %vm178, %v133, 0
    %v1359 = vsel %vm178, %v134, 0
    %v1362 = vsel %vm178, %v135, 0
    %v1365 = vsel %vm178, %v136, 0
    %v1368 = vsel %vm178, %v137, 0
    %1370 = vmatprep.subr.mxu0 0.0
    %1371 = vmatpush1.xpose.msra.mxu0 %v1347
    %1372 = vmatprep.subr.mxu0 0.0
    %1373 = vmatpush1.xpose.msra.mxu0 %v1350
    %1374 = vmatprep.subr.mxu0 0.0
    %1375 = vmatpush1.xpose.msra.mxu0 %v1353
    %1376 = vmatprep.subr.mxu0 0.0
    %1377 = vmatpush1.xpose.msra.mxu0 %v1356
    %1378 = vmatprep.subr.mxu0 0.0
    %1379 = vmatpush1.xpose.msra.mxu0 %v1359
    %1380 = vmatprep.subr.mxu0 0.0
    %1381 = vmatpush1.xpose.msra.mxu0 %v1362
    %1382 = vmatprep.subr.mxu0 0.0
    %1383 = vmatpush1.xpose.msra.mxu0 %v1365
    %1384 = vmatprep.subr.mxu0 0.0
    %1385 = vmatpush1.xpose.msra.mxu0 %v1368
    %1386 = vmatprep.subr.mxu0 0.0
    %1387 = vmatpush1.xpose.msra.mxu0 0.0
    %1388 = vmatprep.subr.mxu0 0.0
    %1389 = vmatpush1.xpose.msra.mxu0 0.0
    %1390 = vmatprep.subr.mxu0 0.0
    %1391 = vmatpush1.xpose.msra.mxu0 0.0
    %1392 = vmatprep.subr.mxu0 0.0
    %1393 = vmatpush1.xpose.msra.mxu0 0.0
    %1394 = vmatprep.subr.mxu0 0.0
    %1395 = vmatpush1.xpose.msra.mxu0 0.0
    %1396 = vmatprep.subr.mxu0 0.0
    %1397 = vmatpush1.xpose.msra.mxu0 0.0
    %1398 = vmatprep.subr.mxu0 0.0
    %1399 = vmatpush1.xpose.msra.mxu0 0.0
    %1400 = vmatprep.subr.mxu0 0.0
    %1401 = vmatpush1.xpose.msra.mxu0 0.0
    %1402 = vmatprep.subr.mxu0 0.0
    %1403 = vmatpush1.xpose.msra.mxu0 0.0
    %1404 = vmatprep.subr.mxu0 0.0
    %1405 = vmatpush1.xpose.msra.mxu0 0.0
    %1406 = vmatprep.subr.mxu0 0.0
    %1407 = vmatpush1.xpose.msra.mxu0 0.0
    %1408 = vmatprep.subr.mxu0 0.0
    %1409 = vmatpush1.xpose.msra.mxu0 0.0
    %1410 = vmatprep.subr.mxu0 0.0
    %1411 = vmatpush1.xpose.msra.mxu0 0.0
    %1412 = vmatprep.subr.mxu0 0.0
    %1413 = vmatpush1.xpose.msra.mxu0 0.0
    %1414 = vmatprep.subr.mxu0 0.0
    %1415 = vmatpush1.xpose.msra.mxu0 0.0
    %1416 = vmatprep.subr.mxu0 0.0
    %1417 = vmatpush1.xpose.msra.mxu0 0.0
    %1418 = vmatprep.subr.mxu0 0.0
    %1419 = vmatpush1.xpose.msra.mxu0 0.0
    %1420 = vmatprep.subr.mxu0 0.0
    %1421 = vmatpush1.xpose.msra.mxu0 0.0
    %1422 = vmatprep.subr.mxu0 0.0
    %1423 = vmatpush1.xpose.msra.mxu0 0.0
    %1424 = vmatprep.subr.mxu0 0.0
    %1425 = vmatpush1.xpose.msra.mxu0 0.0
    %1426 = vmatprep.subr.mxu0 0.0
    %1427 = vmatpush1.xpose.msra.mxu0 0.0
    %1428 = vmatprep.subr.mxu0 0.0
    %1429 = vmatpush1.xpose.msra.mxu0 0.0
    %1430 = vmatprep.subr.mxu0 0.0
    %1431 = vmatpush1.xpose.msra.mxu0 0.0
    %1432 = vmatprep.subr.mxu0 0.0
    %1433 = vmatpush1.xpose.msra.mxu0 0.0
    %1434 = vmatprep.mubr.f32.mxu0 0.0
    %1435 = vmatmul.mubr.f32.gmra.mrb[0].mxu0 %v1344
    %v1436 = vpop.f32.mrb[0].mxu0
    %v1437 = vadd.f32 0.0, %v1436
    %v1438 = vpop.f32.mrb[0].mxu0
    %1439 = vdwg.mxu0
    %v1441 = vsel %vm178, %v31, 0
    %v1444 = vsel %vm178, %v138, 0
    %v1447 = vsel %vm178, %v139, 0
    %v1450 = vsel %vm178, %v140, 0
    %v1453 = vsel %vm178, %v141, 0
    %v1456 = vsel %vm178, %v142, 0
    %v1459 = vsel %vm178, %v143, 0
    %v1462 = vsel %vm178, %v144, 0
    %v1465 = vsel %vm178, %v145, 0
    %1467 = vmatprep.subr.mxu0 0.0
    %1468 = vmatpush1.xpose.msra.mxu0 %v1444
    %1469 = vmatprep.subr.mxu0 0.0
    %1470 = vmatpush1.xpose.msra.mxu0 %v1447
    %1471 = vmatprep.subr.mxu0 0.0
    %1472 = vmatpush1.xpose.msra.mxu0 %v1450
    %1473 = vmatprep.subr.mxu0 0.0
    %1474 = vmatpush1.xpose.msra.mxu0 %v1453
    %1475 = vmatprep.subr.mxu0 0.0
    %1476 = vmatpush1.xpose.msra.mxu0 %v1456
    %1477 = vmatprep.subr.mxu0 0.0
    %1478 = vmatpush1.xpose.msra.mxu0 %v1459
    %1479 = vmatprep.subr.mxu0 0.0
    %1480 = vmatpush1.xpose.msra.mxu0 %v1462
    %1481 = vmatprep.subr.mxu0 0.0
    %1482 = vmatpush1.xpose.msra.mxu0 %v1465
    %1483 = vmatprep.subr.mxu0 0.0
    %1484 = vmatpush1.xpose.msra.mxu0 0.0
    %1485 = vmatprep.subr.mxu0 0.0
    %1486 = vmatpush1.xpose.msra.mxu0 0.0
    %1487 = vmatprep.subr.mxu0 0.0
    %1488 = vmatpush1.xpose.msra.mxu0 0.0
    %1489 = vmatprep.subr.mxu0 0.0
    %1490 = vmatpush1.xpose.msra.mxu0 0.0
    %1491 = vmatprep.subr.mxu0 0.0
    %1492 = vmatpush1.xpose.msra.mxu0 0.0
    %1493 = vmatprep.subr.mxu0 0.0
    %1494 = vmatpush1.xpose.msra.mxu0 0.0
    %1495 = vmatprep.subr.mxu0 0.0
    %1496 = vmatpush1.xpose.msra.mxu0 0.0
    %1497 = vmatprep.subr.mxu0 0.0
    %1498 = vmatpush1.xpose.msra.mxu0 0.0
    %1499 = vmatprep.subr.mxu0 0.0
    %1500 = vmatpush1.xpose.msra.mxu0 0.0
    %1501 = vmatprep.subr.mxu0 0.0
    %1502 = vmatpush1.xpose.msra.mxu0 0.0
    %1503 = vmatprep.subr.mxu0 0.0
    %1504 = vmatpush1.xpose.msra.mxu0 0.0
    %1505 = vmatprep.subr.mxu0 0.0
    %1506 = vmatpush1.xpose.msra.mxu0 0.0
    %1507 = vmatprep.subr.mxu0 0.0
    %1508 = vmatpush1.xpose.msra.mxu0 0.0
    %1509 = vmatprep.subr.mxu0 0.0
    %1510 = vmatpush1.xpose.msra.mxu0 0.0
    %1511 = vmatprep.subr.mxu0 0.0
    %1512 = vmatpush1.xpose.msra.mxu0 0.0
    %1513 = vmatprep.subr.mxu0 0.0
    %1514 = vmatpush1.xpose.msra.mxu0 0.0
    %1515 = vmatprep.subr.mxu0 0.0
    %1516 = vmatpush1.xpose.msra.mxu0 0.0
    %1517 = vmatprep.subr.mxu0 0.0
    %1518 = vmatpush1.xpose.msra.mxu0 0.0
    %1519 = vmatprep.subr.mxu0 0.0
    %1520 = vmatpush1.xpose.msra.mxu0 0.0
    %1521 = vmatprep.subr.mxu0 0.0
    %1522 = vmatpush1.xpose.msra.mxu0 0.0
    %1523 = vmatprep.subr.mxu0 0.0
    %1524 = vmatpush1.xpose.msra.mxu0 0.0
    %1525 = vmatprep.subr.mxu0 0.0
    %1526 = vmatpush1.xpose.msra.mxu0 0.0
    %1527 = vmatprep.subr.mxu0 0.0
    %1528 = vmatpush1.xpose.msra.mxu0 0.0
    %1529 = vmatprep.subr.mxu0 0.0
    %1530 = vmatpush1.xpose.msra.mxu0 0.0
    %1531 = vmatprep.mubr.f32.mxu0 0.0
    %1532 = vmatmul.mubr.f32.gmra.mrb[0].mxu0 %v1441
    %v1533 = vpop.f32.mrb[0].mxu0
    %v1534 = vadd.f32 0.0, %v1533
    %v1535 = vpop.f32.mrb[0].mxu0
    %1536 = vdwg.mxu0
    %v1538 = vsel %vm178, %v32, 0
    %v1541 = vsel %vm178, %v146, 0
    %v1544 = vsel %vm178, %v147, 0
    %v1547 = vsel %vm178, %v148, 0
    %v1550 = vsel %vm178, %v149, 0
    %v1553 = vsel %vm178, %v150, 0
    %v1556 = vsel %vm178, %v151, 0
    %v1559 = vsel %vm178, %v152, 0
    %v1562 = vsel %vm178, %v153, 0
    %1564 = vmatprep.subr.mxu0 0.0
    %1565 = vmatpush1.xpose.msra.mxu0 %v1541
    %1566 = vmatprep.subr.mxu0 0.0
    %1567 = vmatpush1.xpose.msra.mxu0 %v1544
    %1568 = vmatprep.subr.mxu0 0.0
    %1569 = vmatpush1.xpose.msra.mxu0 %v1547
    %1570 = vmatprep.subr.mxu0 0.0
    %1571 = vmatpush1.xpose.msra.mxu0 %v1550
    %1572 = vmatprep.subr.mxu0 0.0
    %1573 = vmatpush1.xpose.msra.mxu0 %v1553
    %1574 = vmatprep.subr.mxu0 0.0
    %1575 = vmatpush1.xpose.msra.mxu0 %v1556
    %1576 = vmatprep.subr.mxu0 0.0
    %1577 = vmatpush1.xpose.msra.mxu0 %v1559
    %1578 = vmatprep.subr.mxu0 0.0
    %1579 = vmatpush1.xpose.msra.mxu0 %v1562
    %1580 = vmatprep.subr.mxu0 0.0
    %1581 = vmatpush1.xpose.msra.mxu0 0.0
    %1582 = vmatprep.subr.mxu0 0.0
    %1583 = vmatpush1.xpose.msra.mxu0 0.0
    %1584 = vmatprep.subr.mxu0 0.0
    %1585 = vmatpush1.xpose.msra.mxu0 0.0
    %1586 = vmatprep.subr.mxu0 0.0
    %1587 = vmatpush1.xpose.msra.mxu0 0.0
    %1588 = vmatprep.subr.mxu0 0.0
    %1589 = vmatpush1.xpose.msra.mxu0 0.0
    %1590 = vmatprep.subr.mxu0 0.0
    %1591 = vmatpush1.xpose.msra.mxu0 0.0
    %1592 = vmatprep.subr.mxu0 0.0
    %1593 = vmatpush1.xpose.msra.mxu0 0.0
    %1594 = vmatprep.subr.mxu0 0.0
    %1595 = vmatpush1.xpose.msra.mxu0 0.0
    %1596 = vmatprep.subr.mxu0 0.0
    %1597 = vmatpush1.xpose.msra.mxu0 0.0
    %1598 = vmatprep.subr.mxu0 0.0
    %1599 = vmatpush1.xpose.msra.mxu0 0.0
    %1600 = vmatprep.subr.mxu0 0.0
    %1601 = vmatpush1.xpose.msra.mxu0 0.0
    %1602 = vmatprep.subr.mxu0 0.0
    %1603 = vmatpush1.xpose.msra.mxu0 0.0
    %1604 = vmatprep.subr.mxu0 0.0
    %1605 = vmatpush1.xpose.msra.mxu0 0.0
    %1606 = vmatprep.subr.mxu0 0.0
    %1607 = vmatpush1.xpose.msra.mxu0 0.0
    %1608 = vmatprep.subr.mxu0 0.0
    %1609 = vmatpush1.xpose.msra.mxu0 0.0
    %1610 = vmatprep.subr.mxu0 0.0
    %1611 = vmatpush1.xpose.msra.mxu0 0.0
    %1612 = vmatprep.subr.mxu0 0.0
    %1613 = vmatpush1.xpose.msra.mxu0 0.0
    %1614 = vmatprep.subr.mxu0 0.0
    %1615 = vmatpush1.xpose.msra.mxu0 0.0
    %1616 = vmatprep.subr.mxu0 0.0
    %1617 = vmatpush1.xpose.msra.mxu0 0.0
    %1618 = vmatprep.subr.mxu0 0.0
    %1619 = vmatpush1.xpose.msra.mxu0 0.0
    %1620 = vmatprep.subr.mxu0 0.0
    %1621 = vmatpush1.xpose.msra.mxu0 0.0
    %1622 = vmatprep.subr.mxu0 0.0
    %1623 = vmatpush1.xpose.msra.mxu0 0.0
    %1624 = vmatprep.subr.mxu0 0.0
    %1625 = vmatpush1.xpose.msra.mxu0 0.0
    %1626 = vmatprep.subr.mxu0 0.0
    %1627 = vmatpush1.xpose.msra.mxu0 0.0
    %1628 = vmatprep.mubr.f32.mxu0 0.0
    %1629 = vmatmul.mubr.f32.gmra.mrb[0].mxu0 %v1538
    %v1630 = vpop.f32.mrb[0].mxu0
    %v1631 = vadd.f32 0.0, %v1630
    %v1632 = vpop.f32.mrb[0].mxu0
    %1633 = vdwg.mxu0
    %v1635 = vsel %vm178, %v33, 0
    %v1638 = vsel %vm178, %v154, 0
    %v1641 = vsel %vm178, %v155, 0
    %v1644 = vsel %vm178, %v156, 0
    %v1647 = vsel %vm178, %v157, 0
    %v1650 = vsel %vm178, %v158, 0
    %v1653 = vsel %vm178, %v159, 0
    %v1656 = vsel %vm178, %v160, 0
    %v1659 = vsel %vm178, %v161, 0
    %1661 = vmatprep.subr.mxu0 0.0
    %1662 = vmatpush1.xpose.msra.mxu0 %v1638
    %1663 = vmatprep.subr.mxu0 0.0
    %1664 = vmatpush1.xpose.msra.mxu0 %v1641
    %1665 = vmatprep.subr.mxu0 0.0
    %1666 = vmatpush1.xpose.msra.mxu0 %v1644
    %1667 = vmatprep.subr.mxu0 0.0
    %1668 = vmatpush1.xpose.msra.mxu0 %v1647
    %1669 = vmatprep.subr.mxu0 0.0
    %1670 = vmatpush1.xpose.msra.mxu0 %v1650
    %1671 = vmatprep.subr.mxu0 0.0
    %1672 = vmatpush1.xpose.msra.mxu0 %v1653
    %1673 = vmatprep.subr.mxu0 0.0
    %1674 = vmatpush1.xpose.msra.mxu0 %v1656
    %1675 = vmatprep.subr.mxu0 0.0
    %1676 = vmatpush1.xpose.msra.mxu0 %v1659
    %1677 = vmatprep.subr.mxu0 0.0
    %1678 = vmatpush1.xpose.msra.mxu0 0.0
    %1679 = vmatprep.subr.mxu0 0.0
    %1680 = vmatpush1.xpose.msra.mxu0 0.0
    %1681 = vmatprep.subr.mxu0 0.0
    %1682 = vmatpush1.xpose.msra.mxu0 0.0
    %1683 = vmatprep.subr.mxu0 0.0
    %1684 = vmatpush1.xpose.msra.mxu0 0.0
    %1685 = vmatprep.subr.mxu0 0.0
    %1686 = vmatpush1.xpose.msra.mxu0 0.0
    %1687 = vmatprep.subr.mxu0 0.0
    %1688 = vmatpush1.xpose.msra.mxu0 0.0
    %1689 = vmatprep.subr.mxu0 0.0
    %1690 = vmatpush1.xpose.msra.mxu0 0.0
    %1691 = vmatprep.subr.mxu0 0.0
    %1692 = vmatpush1.xpose.msra.mxu0 0.0
    %1693 = vmatprep.subr.mxu0 0.0
    %1694 = vmatpush1.xpose.msra.mxu0 0.0
    %1695 = vmatprep.subr.mxu0 0.0
    %1696 = vmatpush1.xpose.msra.mxu0 0.0
    %1697 = vmatprep.subr.mxu0 0.0
    %1698 = vmatpush1.xpose.msra.mxu0 0.0
    %1699 = vmatprep.subr.mxu0 0.0
    %1700 = vmatpush1.xpose.msra.mxu0 0.0
    %1701 = vmatprep.subr.mxu0 0.0
    %1702 = vmatpush1.xpose.msra.mxu0 0.0
    %1703 = vmatprep.subr.mxu0 0.0
    %1704 = vmatpush1.xpose.msra.mxu0 0.0
    %1705 = vmatprep.subr.mxu0 0.0
    %1706 = vmatpush1.xpose.msra.mxu0 0.0
    %1707 = vmatprep.subr.mxu0 0.0
    %1708 = vmatpush1.xpose.msra.mxu0 0.0
    %1709 = vmatprep.subr.mxu0 0.0
    %1710 = vmatpush1.xpose.msra.mxu0 0.0
    %1711 = vmatprep.subr.mxu0 0.0
    %1712 = vmatpush1.xpose.msra.mxu0 0.0
    %1713 = vmatprep.subr.mxu0 0.0
    %1714 = vmatpush1.xpose.msra.mxu0 0.0
    %1715 = vmatprep.subr.mxu0 0.0
    %1716 = vmatpush1.xpose.msra.mxu0 0.0
    %1717 = vmatprep.subr.mxu0 0.0
    %1718 = vmatpush1.xpose.msra.mxu0 0.0
    %1719 = vmatprep.subr.mxu0 0.0
    %1720 = vmatpush1.xpose.msra.mxu0 0.0
    %1721 = vmatprep.subr.mxu0 0.0
    %1722 = vmatpush1.xpose.msra.mxu0 0.0
    %1723 = vmatprep.subr.mxu0 0.0
    %1724 = vmatpush1.xpose.msra.mxu0 0.0
    %1725 = vmatprep.mubr.f32.mxu0 0.0
    %1726 = vmatmul.mubr.f32.gmra.mrb[0].mxu0 %v1635
    %v1727 = vpop.f32.mrb[0].mxu0
    %v1728 = vadd.f32 0.0, %v1727
    %v1729 = vpop.f32.mrb[0].mxu0
    %1730 = vdwg.mxu0
    %v1731 = vrcp.pop 16.0
    %v1732 = vmul.f32 1.0, %v1731
    %v1733 = vmul.f32 %v1732, %v273
    %v1734 = vmul.f32 %v1732, %v370
    %v1735 = vmul.f32 %v1732, %v467
    %v1736 = vmul.f32 %v1732, %v564
    %v1737 = vmul.f32 %v1732, %v661
    %v1738 = vmul.f32 %v1732, %v758
    %v1739 = vmul.f32 %v1732, %v855
    %v1740 = vmul.f32 %v1732, %v952
    %v1741 = vmul.f32 %v1732, %v1049
    %v1742 = vmul.f32 %v1732, %v1146
    %v1743 = vmul.f32 %v1732, %v1243
    %v1744 = vmul.f32 %v1732, %v1340
    %v1745 = vmul.f32 %v1732, %v1437
    %v1746 = vmul.f32 %v1732, %v1534
    %v1747 = vmul.f32 %v1732, %v1631
    %v1748 = vmul.f32 %v1732, %v1728
    %vm1749 = vcmask 517120
    %v1750 = vsel %vm1749, %v1733, 0.0
    %v1751 = vsel %vm1749, %v1734, 0.0
    %v1752 = vadd.f32 %v1750, %v1751
    %v1753 = vsel %vm1749, %v1735, 0.0
    %v1754 = vadd.f32 %v1752, %v1753
    %v1755 = vsel %vm1749, %v1736, 0.0
    %v1756 = vadd.f32 %v1754, %v1755
    %v1757 = vsel %vm1749, %v1737, 0.0
    %v1758 = vadd.f32 %v1756, %v1757
    %v1759 = vsel %vm1749, %v1738, 0.0
    %v1760 = vadd.f32 %v1758, %v1759
    %v1761 = vsel %vm1749, %v1739, 0.0
    %v1762 = vadd.f32 %v1760, %v1761
    %v1763 = vsel %vm1749, %v1740, 0.0
    %v1764 = vadd.f32 %v1762, %v1763
    %v1765 = vsel %vm1749, %v1741, 0.0
    %v1766 = vadd.f32 %v1764, %v1765
    %v1767 = vsel %vm1749, %v1742, 0.0
    %v1768 = vadd.f32 %v1766, %v1767
    %v1769 = vsel %vm1749, %v1743, 0.0
    %v1770 = vadd.f32 %v1768, %v1769
    %v1771 = vsel %vm1749, %v1744, 0.0
    %v1772 = vadd.f32 %v1770, %v1771
    %v1773 = vsel %vm1749, %v1745, 0.0
    %v1774 = vadd.f32 %v1772, %v1773
    %v1775 = vsel %vm1749, %v1746, 0.0
    %v1776 = vadd.f32 %v1774, %v1775
    %v1777 = vsel %vm1749, %v1747, 0.0
    %v1778 = vadd.f32 %v1776, %v1777
    %v1779 = vsel %vm1749, %v1748, 0.0
    %v1780 = vadd.f32 %v1778, %v1779
    %v1781 = vmul.f32 %v1780, %v1780
    %vm1782 = vcmask 523264
    %v1784 = vsel %vm1782, %v1781, 0
    %1786 = vmatprep.subr.mxu0 0.0
    %1787 = vmatpush1.msra.mxu0 %v170
    %1788 = vmatprep.subr.mxu0 0.0
    %1789 = vmatpush1.msra.mxu0 %v171
    %1790 = vmatprep.subr.mxu0 0.0
    %1791 = vmatpush1.msra.mxu0 %v172
    %1792 = vmatprep.subr.mxu0 0.0
    %1793 = vmatpush1.msra.mxu0 %v173
    %1794 = vmatprep.subr.mxu0 0.0
    %1795 = vmatpush1.msra.mxu0 %v174
    %1796 = vmatprep.subr.mxu0 0.0
    %1797 = vmatpush1.msra.mxu0 %v175
    %1798 = vmatprep.subr.mxu0 0.0
    %1799 = vmatpush1.msra.mxu0 %v176
    %1800 = vmatprep.subr.mxu0 0.0
    %1801 = vmatpush1.msra.mxu0 %v177
    %1802 = vmatprep.subr.mxu0 0.0
    %1803 = vmatpush1.msra.mxu0 0.0
    %1804 = vmatprep.subr.mxu0 0.0
    %1805 = vmatpush1.msra.mxu0 0.0
    %1806 = vmatprep.subr.mxu0 0.0
    %1807 = vmatpush1.msra.mxu0 0.0
    %1808 = vmatprep.subr.mxu0 0.0
    %1809 = vmatpush1.msra.mxu0 0.0
    %1810 = vmatprep.subr.mxu0 0.0
    %1811 = vmatpush1.msra.mxu0 0.0
    %1812 = vmatprep.subr.mxu0 0.0
    %1813 = vmatpush1.msra.mxu0 0.0
    %1814 = vmatprep.subr.mxu0 0.0
    %1815 = vmatpush1.msra.mxu0 0.0
    %1816 = vmatprep.subr.mxu0 0.0
    %1817 = vmatpush1.msra.mxu0 0.0
    %1818 = vmatprep.subr.mxu0 0.0
    %1819 = vmatpush1.msra.mxu0 0.0
    %1820 = vmatprep.subr.mxu0 0.0
    %1821 = vmatpush1.msra.mxu0 0.0
    %1822 = vmatprep.subr.mxu0 0.0
    %1823 = vmatpush1.msra.mxu0 0.0
    %1824 = vmatprep.subr.mxu0 0.0
    %1825 = vmatpush1.msra.mxu0 0.0
    %1826 = vmatprep.subr.mxu0 0.0
    %1827 = vmatpush1.msra.mxu0 0.0
    %1828 = vmatprep.subr.mxu0 0.0
    %1829 = vmatpush1.msra.mxu0 0.0
    %1830 = vmatprep.subr.mxu0 0.0
    %1831 = vmatpush1.msra.mxu0 0.0
    %1832 = vmatprep.subr.mxu0 0.0
    %1833 = vmatpush1.msra.mxu0 0.0
    %1834 = vmatprep.subr.mxu0 0.0
    %1835 = vmatpush1.msra.mxu0 0.0
    %1836 = vmatprep.subr.mxu0 0.0
    %1837 = vmatpush1.msra.mxu0 0.0
    %1838 = vmatprep.subr.mxu0 0.0
    %1839 = vmatpush1.msra.mxu0 0.0
    %1840 = vmatprep.subr.mxu0 0.0
    %1841 = vmatpush1.msra.mxu0 0.0
    %1842 = vmatprep.subr.mxu0 0.0
    %1843 = vmatpush1.msra.mxu0 0.0
    %1844 = vmatprep.subr.mxu0 0.0
    %1845 = vmatpush1.msra.mxu0 0.0
    %1846 = vmatprep.subr.mxu0 0.0
    %1847 = vmatpush1.msra.mxu0 0.0
    %1848 = vmatprep.subr.mxu0 0.0
    %1849 = vmatpush1.msra.mxu0 0.0
    %1850 = vmatprep.mubr.f32.mxu0 0.0
    %1851 = vmatmul.mubr.f32.gmra.mrb[0].mxu0 %v1784
    %v1852 = vpop.f32.mrb[0].mxu0
    %v1853 = vadd.f32 0.0, %v1852
    %v1854 = vpop.f32.mrb[0].mxu0
    %1855 = vdwg.mxu0
    %v1856 = vrsqrt.pop %v1853
    %v1857 = vmul.f32 %v1853, %v1856
    %vm1858 = vcmp.eq.f32.partialorder %v1853, inf
    %v1859 = vsel %vm1858, %v1853, %v1857
    %vm1860 = vcmp.eq.f32.partialorder %v1853, 0.0
    %v1861 = vand.u32 %v1853, 2147483648
    %v1862 = vsel %vm1860, %v1861, %v1859
    %v1863 = vadd.f32 %v1853, 1.0
    %v1864 = vrcp.pop %v1863
    %v1865 = vmul.f32 %v1862, %v1864
    %v1866 = vmul.f32 %v1780, %v1865
    %v1867 = vmul.f32 %v273, %v1866
    %v1868 = vmul.f32 %v370, %v1866
    %v1869 = vmul.f32 %v467, %v1866
    %v1870 = vmul.f32 %v564, %v1866
    %v1871 = vmul.f32 %v661, %v1866
    %v1872 = vmul.f32 %v758, %v1866
    %v1873 = vmul.f32 %v855, %v1866
    %v1874 = vmul.f32 %v952, %v1866
    %v1875 = vmul.f32 %v1049, %v1866
    %v1876 = vmul.f32 %v1146, %v1866
    %v1877 = vmul.f32 %v1243, %v1866
    %v1878 = vmul.f32 %v1340, %v1866
    %v1879 = vmul.f32 %v1437, %v1866
    %v1880 = vmul.f32 %v1534, %v1866
    %v1881 = vmul.f32 %v1631, %v1866
    %v1882 = vmul.f32 %v1728, %v1866
    %v1883 = vsel %vm1749, %v1867, 0.0
    %v1884 = vrot.slane %v1883, 4
    %v1885 = vadd.f32 %v1883, %v1884
    %v1886 = vrot.slane %v1885, 2
    %v1887 = vadd.f32 %v1885, %v1886
    %v1888 = vrot.slane %v1887, 1
    %v1889 = vadd.f32 %v1887, %v1888
    %v1890 = vsel %vm1749, %v1868, 0.0
    %v1891 = vrot.slane %v1890, 4
    %v1892 = vadd.f32 %v1890, %v1891
    %v1893 = vrot.slane %v1892, 2
    %v1894 = vadd.f32 %v1892, %v1893
    %v1895 = vrot.slane %v1894, 1
    %v1896 = vadd.f32 %v1894, %v1895
    %v1897 = vsel %vm1749, %v1869, 0.0
    %v1898 = vrot.slane %v1897, 4
    %v1899 = vadd.f32 %v1897, %v1898
    %v1900 = vrot.slane %v1899, 2
    %v1901 = vadd.f32 %v1899, %v1900
    %v1902 = vrot.slane %v1901, 1
    %v1903 = vadd.f32 %v1901, %v1902
    %v1904 = vsel %vm1749, %v1870, 0.0
    %v1905 = vrot.slane %v1904, 4
    %v1906 = vadd.f32 %v1904, %v1905
    %v1907 = vrot.slane %v1906, 2
    %v1908 = vadd.f32 %v1906, %v1907
    %v1909 = vrot.slane %v1908, 1
    %v1910 = vadd.f32 %v1908, %v1909
    %v1911 = vsel %vm1749, %v1871, 0.0
    %v1912 = vrot.slane %v1911, 4
    %v1913 = vadd.f32 %v1911, %v1912
    %v1914 = vrot.slane %v1913, 2
    %v1915 = vadd.f32 %v1913, %v1914
    %v1916 = vrot.slane %v1915, 1
    %v1917 = vadd.f32 %v1915, %v1916
    %v1918 = vsel %vm1749, %v1872, 0.0
    %v1919 = vrot.slane %v1918, 4
    %v1920 = vadd.f32 %v1918, %v1919
    %v1921 = vrot.slane %v1920, 2
    %v1922 = vadd.f32 %v1920, %v1921
    %v1923 = vrot.slane %v1922, 1
    %v1924 = vadd.f32 %v1922, %v1923
    %v1925 = vsel %vm1749, %v1873, 0.0
    %v1926 = vrot.slane %v1925, 4
    %v1927 = vadd.f32 %v1925, %v1926
    %v1928 = vrot.slane %v1927, 2
    %v1929 = vadd.f32 %v1927, %v1928
    %v1930 = vrot.slane %v1929, 1
    %v1931 = vadd.f32 %v1929, %v1930
    %v1932 = vsel %vm1749, %v1874, 0.0
    %v1933 = vrot.slane %v1932, 4
    %v1934 = vadd.f32 %v1932, %v1933
    %v1935 = vrot.slane %v1934, 2
    %v1936 = vadd.f32 %v1934, %v1935
    %v1937 = vrot.slane %v1936, 1
    %v1938 = vadd.f32 %v1936, %v1937
    %v1939 = vsel %vm1749, %v1875, 0.0
    %v1940 = vrot.slane %v1939, 4
    %v1941 = vadd.f32 %v1939, %v1940
    %v1942 = vrot.slane %v1941, 2
    %v1943 = vadd.f32 %v1941, %v1942
    %v1944 = vrot.slane %v1943, 1
    %v1945 = vadd.f32 %v1943, %v1944
    %v1946 = vsel %vm1749, %v1876, 0.0
    %v1947 = vrot.slane %v1946, 4
    %v1948 = vadd.f32 %v1946, %v1947
    %v1949 = vrot.slane %v1948, 2
    %v1950 = vadd.f32 %v1948, %v1949
    %v1951 = vrot.slane %v1950, 1
    %v1952 = vadd.f32 %v1950, %v1951
    %v1953 = vsel %vm1749, %v1877, 0.0
    %v1954 = vrot.slane %v1953, 4
    %v1955 = vadd.f32 %v1953, %v1954
    %v1956 = vrot.slane %v1955, 2
    %v1957 = vadd.f32 %v1955, %v1956
    %v1958 = vrot.slane %v1957, 1
    %v1959 = vadd.f32 %v1957, %v1958
    %v1960 = vsel %vm1749, %v1878, 0.0
    %v1961 = vrot.slane %v1960, 4
    %v1962 = vadd.f32 %v1960, %v1961
    %v1963 = vrot.slane %v1962, 2
    %v1964 = vadd.f32 %v1962, %v1963
    %v1965 = vrot.slane %v1964, 1
    %v1966 = vadd.f32 %v1964, %v1965
    %v1967 = vsel %vm1749, %v1879, 0.0
    %v1968 = vrot.slane %v1967, 4
    %v1969 = vadd.f32 %v1967, %v1968
    %v1970 = vrot.slane %v1969, 2
    %v1971 = vadd.f32 %v1969, %v1970
    %v1972 = vrot.slane %v1971, 1
    %v1973 = vadd.f32 %v1971, %v1972
    %v1974 = vsel %vm1749, %v1880, 0.0
    %v1975 = vrot.slane %v1974, 4
    %v1976 = vadd.f32 %v1974, %v1975
    %v1977 = vrot.slane %v1976, 2
    %v1978 = vadd.f32 %v1976, %v1977
    %v1979 = vrot.slane %v1978, 1
    %v1980 = vadd.f32 %v1978, %v1979
    %v1981 = vsel %vm1749, %v1881, 0.0
    %v1982 = vrot.slane %v1981, 4
    %v1983 = vadd.f32 %v1981, %v1982
    %v1984 = vrot.slane %v1983, 2
    %v1985 = vadd.f32 %v1983, %v1984
    %v1986 = vrot.slane %v1985, 1
    %v1987 = vadd.f32 %v1985, %v1986
    %v1988 = vsel %vm1749, %v1882, 0.0
    %v1989 = vrot.slane %v1988, 4
    %v1990 = vadd.f32 %v1988, %v1989
    %v1991 = vrot.slane %v1990, 2
    %v1992 = vadd.f32 %v1990, %v1991
    %v1993 = vrot.slane %v1992, 1
    %v1994 = vadd.f32 %v1992, %v1993
    %vm2011 = vcmask 1041409
    %v2012 = vsel %vm2011, %v1896, %v1889
    %vm2013 = vcmask 1042434
    %v2014 = vsel %vm2013, %v1903, %v2012
    %vm2015 = vcmask 1043459
    %v2016 = vsel %vm2015, %v1910, %v2014
    %vm2017 = vcmask 1044484
    %v2018 = vsel %vm2017, %v1917, %v2016
    %vm2019 = vcmask 1045509
    %v2020 = vsel %vm2019, %v1924, %v2018
    %vm2021 = vcmask 1046534
    %v2022 = vsel %vm2021, %v1931, %v2020
    %vm2023 = vcmask 1047559
    %v2024 = vsel %vm2023, %v1938, %v2022
    %v2025 = vsel %vm2011, %v1952, %v1945
    %v2026 = vsel %vm2013, %v1959, %v2025
    %v2027 = vsel %vm2015, %v1966, %v2026
    %v2028 = vsel %vm2017, %v1973, %v2027
    %v2029 = vsel %vm2019, %v1980, %v2028
    %v2030 = vsel %vm2021, %v1987, %v2029
    %v2031 = vsel %vm2023, %v1994, %v2030
    %v2032 = vsel %vm1782, %v2024, 0
    %v2034 = vsel %vm1782, %v2031, 0
    %2036 = vmatprep.subr.mxu0 0.0
    %2037 = vmatpush1.msra.mxu0 %v162
    %2038 = vmatprep.subr.mxu0 0.0
    %2039 = vmatpush1.msra.mxu0 %v163
    %2040 = vmatprep.subr.mxu0 0.0
    %2041 = vmatpush1.msra.mxu0 %v164
    %2042 = vmatprep.subr.mxu0 0.0
    %2043 = vmatpush1.msra.mxu0 %v165
    %2044 = vmatprep.subr.mxu0 0.0
    %2045 = vmatpush1.msra.mxu0 %v166
    %2046 = vmatprep.subr.mxu0 0.0
    %2047 = vmatpush1.msra.mxu0 %v167
    %2048 = vmatprep.subr.mxu0 0.0
    %2049 = vmatpush1.msra.mxu0 %v168
    %2050 = vmatprep.subr.mxu0 0.0
    %2051 = vmatpush1.msra.mxu0 %v169
    %2052 = vmatprep.subr.mxu0 0.0
    %2053 = vmatpush1.msra.mxu0 0.0
    %2054 = vmatprep.subr.mxu0 0.0
    %2055 = vmatpush1.msra.mxu0 0.0
    %2056 = vmatprep.subr.mxu0 0.0
    %2057 = vmatpush1.msra.mxu0 0.0
    %2058 = vmatprep.subr.mxu0 0.0
    %2059 = vmatpush1.msra.mxu0 0.0
    %2060 = vmatprep.subr.mxu0 0.0
    %2061 = vmatpush1.msra.mxu0 0.0
    %2062 = vmatprep.subr.mxu0 0.0
    %2063 = vmatpush1.msra.mxu0 0.0
    %2064 = vmatprep.subr.mxu0 0.0
    %2065 = vmatpush1.msra.mxu0 0.0
    %2066 = vmatprep.subr.mxu0 0.0
    %2067 = vmatpush1.msra.mxu0 0.0
    %2068 = vmatprep.subr.mxu0 0.0
    %2069 = vmatpush1.msra.mxu0 0.0
    %2070 = vmatprep.subr.mxu0 0.0
    %2071 = vmatpush1.msra.mxu0 0.0
    %2072 = vmatprep.subr.mxu0 0.0
    %2073 = vmatpush1.msra.mxu0 0.0
    %2074 = vmatprep.subr.mxu0 0.0
    %2075 = vmatpush1.msra.mxu0 0.0
    %2076 = vmatprep.subr.mxu0 0.0
    %2077 = vmatpush1.msra.mxu0 0.0
    %2078 = vmatprep.subr.mxu0 0.0
    %2079 = vmatpush1.msra.mxu0 0.0
    %2080 = vmatprep.subr.mxu0 0.0
    %2081 = vmatpush1.msra.mxu0 0.0
    %2082 = vmatprep.subr.mxu0 0.0
    %2083 = vmatpush1.msra.mxu0 0.0
    %2084 = vmatprep.subr.mxu0 0.0
    %2085 = vmatpush1.msra.mxu0 0.0
    %2086 = vmatprep.subr.mxu0 0.0
    %2087 = vmatpush1.msra.mxu0 0.0
    %2088 = vmatprep.subr.mxu0 0.0
    %2089 = vmatpush1.msra.mxu0 0.0
    %2090 = vmatprep.subr.mxu0 0.0
    %2091 = vmatpush1.msra.mxu0 0.0
    %2092 = vmatprep.subr.mxu0 0.0
    %2093 = vmatpush1.msra.mxu0 0.0
    %2094 = vmatprep.subr.mxu0 0.0
    %2095 = vmatpush1.msra.mxu0 0.0
    %2096 = vmatprep.subr.mxu0 0.0
    %2097 = vmatpush1.msra.mxu0 0.0
    %2098 = vmatprep.subr.mxu0 0.0
    %2099 = vmatpush1.msra.mxu0 0.0
    %2100 = vmatprep.mubr.f32.mxu0 0.0
    %2101 = vmatmul.mubr.f32.gmra.mrb[0].mxu0 %v2032
    %v2102 = vpop.f32.mrb[0].mxu0
    %v2103 = vadd.f32 0.0, %v2102
    %v2104 = vpop.f32.mrb[0].mxu0
    %2105 = vmatprep.mubr.f32.mxu0 0.0
    %2106 = vmatmul.mubr.f32.gmra.mrb[0].mxu0 %v2034
    %v2107 = vpop.f32.mrb[0].mxu0
    %v2108 = vadd.f32 0.0, %v2107
    %v2109 = vpop.f32.mrb[0].mxu0
    %2110 = vdwg.mxu0
    %v2111 = vmul.f32 %v2103, 0.5
    %v2112 = vmul.f32 %v2108, 0.5
    %v2113 = vadd.f32 %v2111, 0.0
    %v2114 = vadd.f32 %v2112, 0.0
    %v2115 = vsel %vm1782, %v2113, -inf
    %v2116 = vsel %vm1782, %v2114, -inf
    %v2117 = vmax.f32 %v2115, %v2116
    %v2118 = vrot.slane %v2117, 4
    %v2119 = vmax.f32 %v2117, %v2118
    %v2120 = vrot.slane %v2119, 2
    %v2121 = vmax.f32 %v2119, %v2120
    %v2122 = vrot.slane %v2121, 1
    %v2123 = vmax.f32 %v2121, %v2122
    %v2124 = vsub.f32 %v2113, %v2123
    %v2125 = vsub.f32 %v2114, %v2123
    %v2126 = vmul.f32 %v2124, 1.442695
    %v2127 = vpow.pop %v2126
    %v2128 = vmul.f32 %v2125, 1.442695
    %v2129 = vpow.pop %v2128
    %v2130 = vsel %vm1782, %v2127, 0.0
    %v2131 = vsel %vm1782, %v2129, 0.0
    %v2132 = vadd.f32 %v2130, %v2131
    %v2133 = vrot.slane %v2132, 4
    %v2134 = vadd.f32 %v2132, %v2133
    %v2135 = vrot.slane %v2134, 2
    %v2136 = vadd.f32 %v2134, %v2135
    %v2137 = vrot.slane %v2136, 1
    %v2138 = vadd.f32 %v2136, %v2137
    %v2139 = vrcp.pop %v2138
    %v2140 = vmul.f32 %v2127, %v2139
    %v2141 = vmul.f32 %v2129, %v2139
    %v2144 = vcombine.high %v2140, %v2140
    %v2146 = vunpack.c.l.s4 1966171168
    %v2147 = vunpack.c.0.s8 %v2146
    %v2148 = vlaneseq
    %v2149 = vshrl.u32 %v2148, 7
    %v2150 = vsub.s32 %v2147, %v2149
    %v2151 = vrot.slane %v2140, %v2150
    %v2153 = vunpack.c.l.s4 1966171168
    %v2154 = vunpack.c.0.s8 %v2153
    %v2155 = vlaneseq
    %v2156 = vshrl.u32 %v2155, 7
    %v2157 = vsub.s32 %v2154, %v2156
    %v2158 = vrot.slane %v2144, %v2157
    %v2159 = vcombine.high %v2151, %v2151
    %v2160 = vcombine.high %v2158, %v2158
    %v2162 = vunpack.c.l.s4 1966171168
    %v2163 = vunpack.c.0.s8 %v2162
    %v2164 = vlaneseq
    %v2165 = vshrl.u32 %v2164, 7
    %v2166 = vsub.s32 %v2163, %v2165
    %v2167 = vrot.slane %v2151, %v2166
    %v2169 = vunpack.c.l.s4 1966171168
    %v2170 = vunpack.c.0.s8 %v2169
    %v2171 = vlaneseq
    %v2172 = vshrl.u32 %v2171, 7
    %v2173 = vsub.s32 %v2170, %v2172
    %v2174 = vrot.slane %v2158, %v2173
    %v2176 = vunpack.c.l.s4 1966171168
    %v2177 = vunpack.c.0.s8 %v2176
    %v2178 = vlaneseq
    %v2179 = vshrl.u32 %v2178, 7
    %v2180 = vsub.s32 %v2177, %v2179
    %v2181 = vrot.slane %v2159, %v2180
    %v2183 = vunpack.c.l.s4 1966171168
    %v2184 = vunpack.c.0.s8 %v2183
    %v2185 = vlaneseq
    %v2186 = vshrl.u32 %v2185, 7
    %v2187 = vsub.s32 %v2184, %v2186
    %v2188 = vrot.slane %v2160, %v2187
    %v2189 = vcombine.high %v2167, %v2167
    %v2190 = vcombine.high %v2174, %v2174
    %v2191 = vcombine.high %v2181, %v2181
    %v2192 = vcombine.high %v2188, %v2188
    %v2193 = vcombine.high %v2141, %v2141
    %v2195 = vunpack.c.l.s4 1966171168
    %v2196 = vunpack.c.0.s8 %v2195
    %v2197 = vlaneseq
    %v2198 = vshrl.u32 %v2197, 7
    %v2199 = vsub.s32 %v2196, %v2198
    %v2200 = vrot.slane %v2141, %v2199
    %v2202 = vunpack.c.l.s4 1966171168
    %v2203 = vunpack.c.0.s8 %v2202
    %v2204 = vlaneseq
    %v2205 = vshrl.u32 %v2204, 7
    %v2206 = vsub.s32 %v2203, %v2205
    %v2207 = vrot.slane %v2193, %v2206
    %v2208 = vcombine.high %v2200, %v2200
    %v2209 = vcombine.high %v2207, %v2207
    %v2211 = vunpack.c.l.s4 1966171168
    %v2212 = vunpack.c.0.s8 %v2211
    %v2213 = vlaneseq
    %v2214 = vshrl.u32 %v2213, 7
    %v2215 = vsub.s32 %v2212, %v2214
    %v2216 = vrot.slane %v2200, %v2215
    %v2218 = vunpack.c.l.s4 1966171168
    %v2219 = vunpack.c.0.s8 %v2218
    %v2220 = vlaneseq
    %v2221 = vshrl.u32 %v2220, 7
    %v2222 = vsub.s32 %v2219, %v2221
    %v2223 = vrot.slane %v2207, %v2222
    %v2225 = vunpack.c.l.s4 1966171168
    %v2226 = vunpack.c.0.s8 %v2225
    %v2227 = vlaneseq
    %v2228 = vshrl.u32 %v2227, 7
    %v2229 = vsub.s32 %v2226, %v2228
    %v2230 = vrot.slane %v2208, %v2229
    %v2232 = vunpack.c.l.s4 1966171168
    %v2233 = vunpack.c.0.s8 %v2232
    %v2234 = vlaneseq
    %v2235 = vshrl.u32 %v2234, 7
    %v2236 = vsub.s32 %v2233, %v2235
    %v2237 = vrot.slane %v2209, %v2236
    %v2238 = vcombine.high %v2216, %v2216
    %v2239 = vcombine.high %v2223, %v2223
    %v2240 = vcombine.high %v2230, %v2230
    %v2241 = vcombine.high %v2237, %v2237
    %v2242 = vlaneseq
    %v2243 = vshrl.u32 %v2242, 7
    %v2244 = vsub.s32 0, %v2243
    %v2245 = vrot.slane %v2167, %v2244
    %v2246 = vlaneseq
    %v2247 = vshrl.u32 %v2246, 7
    %v2248 = vsub.s32 0, %v2247
    %v2249 = vrot.slane %v2181, %v2248
    %v2250 = vlaneseq
    %v2251 = vshrl.u32 %v2250, 7
    %v2252 = vsub.s32 0, %v2251
    %v2253 = vrot.slane %v2189, %v2252
    %v2254 = vlaneseq
    %v2255 = vshrl.u32 %v2254, 7
    %v2256 = vsub.s32 0, %v2255
    %v2257 = vrot.slane %v2191, %v2256
    %v2258 = vlaneseq
    %v2259 = vshrl.u32 %v2258, 7
    %v2260 = vsub.s32 0, %v2259
    %v2261 = vrot.slane %v2174, %v2260
    %v2262 = vlaneseq
    %v2263 = vshrl.u32 %v2262, 7
    %v2264 = vsub.s32 0, %v2263
    %v2265 = vrot.slane %v2188, %v2264
    %v2266 = vlaneseq
    %v2267 = vshrl.u32 %v2266, 7
    %v2268 = vsub.s32 0, %v2267
    %v2269 = vrot.slane %v2190, %v2268
    %v2270 = vlaneseq
    %v2271 = vshrl.u32 %v2270, 7
    %v2272 = vsub.s32 0, %v2271
    %v2273 = vrot.slane %v2192, %v2272
    %v2274 = vlaneseq
    %v2275 = vshrl.u32 %v2274, 7
    %v2276 = vsub.s32 0, %v2275
    %v2277 = vrot.slane %v2216, %v2276
    %v2278 = vlaneseq
    %v2279 = vshrl.u32 %v2278, 7
    %v2280 = vsub.s32 0, %v2279
    %v2281 = vrot.slane %v2230, %v2280
    %v2282 = vlaneseq
    %v2283 = vshrl.u32 %v2282, 7
    %v2284 = vsub.s32 0, %v2283
    %v2285 = vrot.slane %v2238, %v2284
    %v2286 = vlaneseq
    %v2287 = vshrl.u32 %v2286, 7
    %v2288 = vsub.s32 0, %v2287
    %v2289 = vrot.slane %v2240, %v2288
    %v2290 = vlaneseq
    %v2291 = vshrl.u32 %v2290, 7
    %v2292 = vsub.s32 0, %v2291
    %v2293 = vrot.slane %v2223, %v2292
    %v2294 = vlaneseq
    %v2295 = vshrl.u32 %v2294, 7
    %v2296 = vsub.s32 0, %v2295
    %v2297 = vrot.slane %v2237, %v2296
    %v2298 = vlaneseq
    %v2299 = vshrl.u32 %v2298, 7
    %v2300 = vsub.s32 0, %v2299
    %v2301 = vrot.slane %v2239, %v2300
    %v2302 = vlaneseq
    %v2303 = vshrl.u32 %v2302, 7
    %v2304 = vsub.s32 0, %v2303
    %v2305 = vrot.slane %v2241, %v2304
    %v2322 = vmul.f32 %v2245, %v273
    %v2323 = vmul.f32 %v2249, %v370
    %v2324 = vmul.f32 %v2253, %v467
    %v2325 = vmul.f32 %v2257, %v564
    %v2326 = vmul.f32 %v2261, %v661
    %v2327 = vmul.f32 %v2265, %v758
    %v2328 = vmul.f32 %v2269, %v855
    %v2329 = vmul.f32 %v2273, %v952
    %v2330 = vmul.f32 %v2277, %v1049
    %v2331 = vmul.f32 %v2281, %v1146
    %v2332 = vmul.f32 %v2285, %v1243
    %v2333 = vmul.f32 %v2289, %v1340
    %v2334 = vmul.f32 %v2293, %v1437
    %v2335 = vmul.f32 %v2297, %v1534
    %v2336 = vmul.f32 %v2301, %v1631
    %v2337 = vmul.f32 %v2305, %v1728
    %v2338 = vsel %vm1749, %v2322, 0.0
    %v2339 = vsel %vm1749, %v2323, 0.0
    %v2340 = vadd.f32 %v2338, %v2339
    %v2341 = vsel %vm1749, %v2324, 0.0
    %v2342 = vadd.f32 %v2340, %v2341
    %v2343 = vsel %vm1749, %v2325, 0.0
    %v2344 = vadd.f32 %v2342, %v2343
    %v2345 = vsel %vm1749, %v2326, 0.0
    %v2346 = vadd.f32 %v2344, %v2345
    %v2347 = vsel %vm1749, %v2327, 0.0
    %v2348 = vadd.f32 %v2346, %v2347
    %v2349 = vsel %vm1749, %v2328, 0.0
    %v2350 = vadd.f32 %v2348, %v2349
    %v2351 = vsel %vm1749, %v2329, 0.0
    %v2352 = vadd.f32 %v2350, %v2351
    %v2353 = vsel %vm1749, %v2330, 0.0
    %v2354 = vadd.f32 %v2352, %v2353
    %v2355 = vsel %vm1749, %v2331, 0.0
    %v2356 = vadd.f32 %v2354, %v2355
    %v2357 = vsel %vm1749, %v2332, 0.0
    %v2358 = vadd.f32 %v2356, %v2357
    %v2359 = vsel %vm1749, %v2333, 0.0
    %v2360 = vadd.f32 %v2358, %v2359
    %v2361 = vsel %vm1749, %v2334, 0.0
    %v2362 = vadd.f32 %v2360, %v2361
    %v2363 = vsel %vm1749, %v2335, 0.0
    %v2364 = vadd.f32 %v2362, %v2363
    %v2365 = vsel %vm1749, %v2336, 0.0
    %v2366 = vadd.f32 %v2364, %v2365
    %v2367 = vsel %vm1749, %v2337, 0.0
    %v2368 = vadd.f32 %v2366, %v2367
    %v2369 = vmul.f32 %v2368, %v2368
    %v2371 = vsel %vm1782, %v2369, 0
    %2373 = vmatprep.subr.mxu0 0.0
    %2374 = vmatpush1.msra.mxu0 %v170
    %2375 = vmatprep.subr.mxu0 0.0
    %2376 = vmatpush1.msra.mxu0 %v171
    %2377 = vmatprep.subr.mxu0 0.0
    %2378 = vmatpush1.msra.mxu0 %v172
    %2379 = vmatprep.subr.mxu0 0.0
    %2380 = vmatpush1.msra.mxu0 %v173
    %2381 = vmatprep.subr.mxu0 0.0
    %2382 = vmatpush1.msra.mxu0 %v174
    %2383 = vmatprep.subr.mxu0 0.0
    %2384 = vmatpush1.msra.mxu0 %v175
    %2385 = vmatprep.subr.mxu0 0.0
    %2386 = vmatpush1.msra.mxu0 %v176
    %2387 = vmatprep.subr.mxu0 0.0
    %2388 = vmatpush1.msra.mxu0 %v177
    %2389 = vmatprep.subr.mxu0 0.0
    %2390 = vmatpush1.msra.mxu0 0.0
    %2391 = vmatprep.subr.mxu0 0.0
    %2392 = vmatpush1.msra.mxu0 0.0
    %2393 = vmatprep.subr.mxu0 0.0
    %2394 = vmatpush1.msra.mxu0 0.0
    %2395 = vmatprep.subr.mxu0 0.0
    %2396 = vmatpush1.msra.mxu0 0.0
    %2397 = vmatprep.subr.mxu0 0.0
    %2398 = vmatpush1.msra.mxu0 0.0
    %2399 = vmatprep.subr.mxu0 0.0
    %2400 = vmatpush1.msra.mxu0 0.0
    %2401 = vmatprep.subr.mxu0 0.0
    %2402 = vmatpush1.msra.mxu0 0.0
    %2403 = vmatprep.subr.mxu0 0.0
    %2404 = vmatpush1.msra.mxu0 0.0
    %2405 = vmatprep.subr.mxu0 0.0
    %2406 = vmatpush1.msra.mxu0 0.0
    %2407 = vmatprep.subr.mxu0 0.0
    %2408 = vmatpush1.msra.mxu0 0.0
    %2409 = vmatprep.subr.mxu0 0.0
    %2410 = vmatpush1.msra.mxu0 0.0
    %2411 = vmatprep.subr.mxu0 0.0
    %2412 = vmatpush1.msra.mxu0 0.0
    %2413 = vmatprep.subr.mxu0 0.0
    %2414 = vmatpush1.msra.mxu0 0.0
    %2415 = vmatprep.subr.mxu0 0.0
    %2416 = vmatpush1.msra.mxu0 0.0
    %2417 = vmatprep.subr.mxu0 0.0
    %2418 = vmatpush1.msra.mxu0 0.0
    %2419 = vmatprep.subr.mxu0 0.0
    %2420 = vmatpush1.msra.mxu0 0.0
    %2421 = vmatprep.subr.mxu0 0.0
    %2422 = vmatpush1.msra.mxu0 0.0
    %2423 = vmatprep.subr.mxu0 0.0
    %2424 = vmatpush1.msra.mxu0 0.0
    %2425 = vmatprep.subr.mxu0 0.0
    %2426 = vmatpush1.msra.mxu0 0.0
    %2427 = vmatprep.subr.mxu0 0.0
    %2428 = vmatpush1.msra.mxu0 0.0
    %2429 = vmatprep.subr.mxu0 0.0
    %2430 = vmatpush1.msra.mxu0 0.0
    %2431 = vmatprep.subr.mxu0 0.0
    %2432 = vmatpush1.msra.mxu0 0.0
    %2433 = vmatprep.subr.mxu0 0.0
    %2434 = vmatpush1.msra.mxu0 0.0
    %2435 = vmatprep.subr.mxu0 0.0
    %2436 = vmatpush1.msra.mxu0 0.0
    %2437 = vmatprep.mubr.f32.mxu0 0.0
    %2438 = vmatmul.mubr.f32.gmra.mrb[0].mxu0 %v2371
    %v2439 = vpop.f32.mrb[0].mxu0
    %v2440 = vadd.f32 0.0, %v2439
    %v2441 = vpop.f32.mrb[0].mxu0
    %2442 = vdwg.mxu0
    %v2443 = vrsqrt.pop %v2440
    %v2444 = vmul.f32 %v2440, %v2443
    %vm2445 = vcmp.eq.f32.partialorder %v2440, inf
    %v2446 = vsel %vm2445, %v2440, %v2444
    %vm2447 = vcmp.eq.f32.partialorder %v2440, 0.0
    %v2448 = vand.u32 %v2440, 2147483648
    %v2449 = vsel %vm2447, %v2448, %v2446
    %v2450 = vadd.f32 %v2440, 1.0
    %v2451 = vrcp.pop %v2450
    %v2452 = vmul.f32 %v2449, %v2451
    %v2453 = vmul.f32 %v2368, %v2452
    %v2454 = vmul.f32 %v273, %v2453
    %v2455 = vmul.f32 %v370, %v2453
    %v2456 = vmul.f32 %v467, %v2453
    %v2457 = vmul.f32 %v564, %v2453
    %v2458 = vmul.f32 %v661, %v2453
    %v2459 = vmul.f32 %v758, %v2453
    %v2460 = vmul.f32 %v855, %v2453
    %v2461 = vmul.f32 %v952, %v2453
    %v2462 = vmul.f32 %v1049, %v2453
    %v2463 = vmul.f32 %v1146, %v2453
    %v2464 = vmul.f32 %v1243, %v2453
    %v2465 = vmul.f32 %v1340, %v2453
    %v2466 = vmul.f32 %v1437, %v2453
    %v2467 = vmul.f32 %v1534, %v2453
    %v2468 = vmul.f32 %v1631, %v2453
    %v2469 = vmul.f32 %v1728, %v2453
    %v2470 = vsel %vm1749, %v2454, 0.0
    %v2471 = vrot.slane %v2470, 4
    %v2472 = vadd.f32 %v2470, %v2471
    %v2473 = vrot.slane %v2472, 2
    %v2474 = vadd.f32 %v2472, %v2473
    %v2475 = vrot.slane %v2474, 1
    %v2476 = vadd.f32 %v2474, %v2475
    %v2477 = vsel %vm1749, %v2455, 0.0
    %v2478 = vrot.slane %v2477, 4
    %v2479 = vadd.f32 %v2477, %v2478
    %v2480 = vrot.slane %v2479, 2
    %v2481 = vadd.f32 %v2479, %v2480
    %v2482 = vrot.slane %v2481, 1
    %v2483 = vadd.f32 %v2481, %v2482
    %v2484 = vsel %vm1749, %v2456, 0.0
    %v2485 = vrot.slane %v2484, 4
    %v2486 = vadd.f32 %v2484, %v2485
    %v2487 = vrot.slane %v2486, 2
    %v2488 = vadd.f32 %v2486, %v2487
    %v2489 = vrot.slane %v2488, 1
    %v2490 = vadd.f32 %v2488, %v2489
    %v2491 = vsel %vm1749, %v2457, 0.0
    %v2492 = vrot.slane %v2491, 4
    %v2493 = vadd.f32 %v2491, %v2492
    %v2494 = vrot.slane %v2493, 2
    %v2495 = vadd.f32 %v2493, %v2494
    %v2496 = vrot.slane %v2495, 1
    %v2497 = vadd.f32 %v2495, %v2496
    %v2498 = vsel %vm1749, %v2458, 0.0
    %v2499 = vrot.slane %v2498, 4
    %v2500 = vadd.f32 %v2498, %v2499
    %v2501 = vrot.slane %v2500, 2
    %v2502 = vadd.f32 %v2500, %v2501
    %v2503 = vrot.slane %v2502, 1
    %v2504 = vadd.f32 %v2502, %v2503
    %v2505 = vsel %vm1749, %v2459, 0.0
    %v2506 = vrot.slane %v2505, 4
    %v2507 = vadd.f32 %v2505, %v2506
    %v2508 = vrot.slane %v2507, 2
    %v2509 = vadd.f32 %v2507, %v2508
    %v2510 = vrot.slane %v2509, 1
    %v2511 = vadd.f32 %v2509, %v2510
    %v2512 = vsel %vm1749, %v2460, 0.0
    %v2513 = vrot.slane %v2512, 4
    %v2514 = vadd.f32 %v2512, %v2513
    %v2515 = vrot.slane %v2514, 2
    %v2516 = vadd.f32 %v2514, %v2515
    %v2517 = vrot.slane %v2516, 1
    %v2518 = vadd.f32 %v2516, %v2517
    %v2519 = vsel %vm1749, %v2461, 0.0
    %v2520 = vrot.slane %v2519, 4
    %v2521 = vadd.f32 %v2519, %v2520
    %v2522 = vrot.slane %v2521, 2
    %v2523 = vadd.f32 %v2521, %v2522
    %v2524 = vrot.slane %v2523, 1
    %v2525 = vadd.f32 %v2523, %v2524
    %v2526 = vsel %vm1749, %v2462, 0.0
    %v2527 = vrot.slane %v2526, 4
    %v2528 = vadd.f32 %v2526, %v2527
    %v2529 = vrot.slane %v2528, 2
    %v2530 = vadd.f32 %v2528, %v2529
    %v2531 = vrot.slane %v2530, 1
    %v2532 = vadd.f32 %v2530, %v2531
    %v2533 = vsel %vm1749, %v2463, 0.0
    %v2534 = vrot.slane %v2533, 4
    %v2535 = vadd.f32 %v2533, %v2534
    %v2536 = vrot.slane %v2535, 2
    %v2537 = vadd.f32 %v2535, %v2536
    %v2538 = vrot.slane %v2537, 1
    %v2539 = vadd.f32 %v2537, %v2538
    %v2540 = vsel %vm1749, %v2464, 0.0
    %v2541 = vrot.slane %v2540, 4
    %v2542 = vadd.f32 %v2540, %v2541
    %v2543 = vrot.slane %v2542, 2
    %v2544 = vadd.f32 %v2542, %v2543
    %v2545 = vrot.slane %v2544, 1
    %v2546 = vadd.f32 %v2544, %v2545
    %v2547 = vsel %vm1749, %v2465, 0.0
    %v2548 = vrot.slane %v2547, 4
    %v2549 = vadd.f32 %v2547, %v2548
    %v2550 = vrot.slane %v2549, 2
    %v2551 = vadd.f32 %v2549, %v2550
    %v2552 = vrot.slane %v2551, 1
    %v2553 = vadd.f32 %v2551, %v2552
    %v2554 = vsel %vm1749, %v2466, 0.0
    %v2555 = vrot.slane %v2554, 4
    %v2556 = vadd.f32 %v2554, %v2555
    %v2557 = vrot.slane %v2556, 2
    %v2558 = vadd.f32 %v2556, %v2557
    %v2559 = vrot.slane %v2558, 1
    %v2560 = vadd.f32 %v2558, %v2559
    %v2561 = vsel %vm1749, %v2467, 0.0
    %v2562 = vrot.slane %v2561, 4
    %v2563 = vadd.f32 %v2561, %v2562
    %v2564 = vrot.slane %v2563, 2
    %v2565 = vadd.f32 %v2563, %v2564
    %v2566 = vrot.slane %v2565, 1
    %v2567 = vadd.f32 %v2565, %v2566
    %v2568 = vsel %vm1749, %v2468, 0.0
    %v2569 = vrot.slane %v2568, 4
    %v2570 = vadd.f32 %v2568, %v2569
    %v2571 = vrot.slane %v2570, 2
    %v2572 = vadd.f32 %v2570, %v2571
    %v2573 = vrot.slane %v2572, 1
    %v2574 = vadd.f32 %v2572, %v2573
    %v2575 = vsel %vm1749, %v2469, 0.0
    %v2576 = vrot.slane %v2575, 4
    %v2577 = vadd.f32 %v2575, %v2576
    %v2578 = vrot.slane %v2577, 2
    %v2579 = vadd.f32 %v2577, %v2578
    %v2580 = vrot.slane %v2579, 1
    %v2581 = vadd.f32 %v2579, %v2580
    %v2598 = vsel %vm2011, %v2483, %v2476
    %v2599 = vsel %vm2013, %v2490, %v2598
    %v2600 = vsel %vm2015, %v2497, %v2599
    %v2601 = vsel %vm2017, %v2504, %v2600
    %v2602 = vsel %vm2019, %v2511, %v2601
    %v2603 = vsel %vm2021, %v2518, %v2602
    %v2604 = vsel %vm2023, %v2525, %v2603
    %v2605 = vsel %vm2011, %v2539, %v2532
    %v2606 = vsel %vm2013, %v2546, %v2605
    %v2607 = vsel %vm2015, %v2553, %v2606
    %v2608 = vsel %vm2017, %v2560, %v2607
    %v2609 = vsel %vm2019, %v2567, %v2608
    %v2610 = vsel %vm2021, %v2574, %v2609
    %v2611 = vsel %vm2023, %v2581, %v2610
    %v2612 = vsel %vm1782, %v2604, 0
    %v2614 = vsel %vm1782, %v2611, 0
    %2616 = vmatprep.subr.mxu0 0.0
    %2617 = vmatpush1.msra.mxu0 %v162
    %2618 = vmatprep.subr.mxu0 0.0
    %2619 = vmatpush1.msra.mxu0 %v163
    %2620 = vmatprep.subr.mxu0 0.0
    %2621 = vmatpush1.msra.mxu0 %v164
    %2622 = vmatprep.subr.mxu0 0.0
    %2623 = vmatpush1.msra.mxu0 %v165
    %2624 = vmatprep.subr.mxu0 0.0
    %2625 = vmatpush1.msra.mxu0 %v166
    %2626 = vmatprep.subr.mxu0 0.0
    %2627 = vmatpush1.msra.mxu0 %v167
    %2628 = vmatprep.subr.mxu0 0.0
    %2629 = vmatpush1.msra.mxu0 %v168
    %2630 = vmatprep.subr.mxu0 0.0
    %2631 = vmatpush1.msra.mxu0 %v169
    %2632 = vmatprep.subr.mxu0 0.0
    %2633 = vmatpush1.msra.mxu0 0.0
    %2634 = vmatprep.subr.mxu0 0.0
    %2635 = vmatpush1.msra.mxu0 0.0
    %2636 = vmatprep.subr.mxu0 0.0
    %2637 = vmatpush1.msra.mxu0 0.0
    %2638 = vmatprep.subr.mxu0 0.0
    %2639 = vmatpush1.msra.mxu0 0.0
    %2640 = vmatprep.subr.mxu0 0.0
    %2641 = vmatpush1.msra.mxu0 0.0
    %2642 = vmatprep.subr.mxu0 0.0
    %2643 = vmatpush1.msra.mxu0 0.0
    %2644 = vmatprep.subr.mxu0 0.0
    %2645 = vmatpush1.msra.mxu0 0.0
    %2646 = vmatprep.subr.mxu0 0.0
    %2647 = vmatpush1.msra.mxu0 0.0
    %2648 = vmatprep.subr.mxu0 0.0
    %2649 = vmatpush1.msra.mxu0 0.0
    %2650 = vmatprep.subr.mxu0 0.0
    %2651 = vmatpush1.msra.mxu0 0.0
    %2652 = vmatprep.subr.mxu0 0.0
    %2653 = vmatpush1.msra.mxu0 0.0
    %2654 = vmatprep.subr.mxu0 0.0
    %2655 = vmatpush1.msra.mxu0 0.0
    %2656 = vmatprep.subr.mxu0 0.0
    %2657 = vmatpush1.msra.mxu0 0.0
    %2658 = vmatprep.subr.mxu0 0.0
    %2659 = vmatpush1.msra.mxu0 0.0
    %2660 = vmatprep.subr.mxu0 0.0
    %2661 = vmatpush1.msra.mxu0 0.0
    %2662 = vmatprep.subr.mxu0 0.0
    %2663 = vmatpush1.msra.mxu0 0.0
    %2664 = vmatprep.subr.mxu0 0.0
    %2665 = vmatpush1.msra.mxu0 0.0
    %2666 = vmatprep.subr.mxu0 0.0
    %2667 = vmatpush1.msra.mxu0 0.0
    %2668 = vmatprep.subr.mxu0 0.0
    %2669 = vmatpush1.msra.mxu0 0.0
    %2670 = vmatprep.subr.mxu0 0.0
    %2671 = vmatpush1.msra.mxu0 0.0
    %2672 = vmatprep.subr.mxu0 0.0
    %2673 = vmatpush1.msra.mxu0 0.0
    %2674 = vmatprep.subr.mxu0 0.0
    %2675 = vmatpush1.msra.mxu0 0.0
    %2676 = vmatprep.subr.mxu0 0.0
    %2677 = vmatpush1.msra.mxu0 0.0
    %2678 = vmatprep.subr.mxu0 0.0
    %2679 = vmatpush1.msra.mxu0 0.0
    %2680 = vmatprep.mubr.f32.mxu0 0.0
    %2681 = vmatmul.mubr.f32.gmra.mrb[0].mxu0 %v2612
    %v2682 = vpop.f32.mrb[0].mxu0
    %v2683 = vadd.f32 0.0, %v2682
    %v2684 = vpop.f32.mrb[0].mxu0
    %2685 = vmatprep.mubr.f32.mxu0 0.0
    %2686 = vmatmul.mubr.f32.gmra.mrb[0].mxu0 %v2614
    %v2687 = vpop.f32.mrb[0].mxu0
    %v2688 = vadd.f32 0.0, %v2687
    %v2689 = vpop.f32.mrb[0].mxu0
    %2690 = vdwg.mxu0
    %v2691 = vmul.f32 %v2683, 0.5
    %v2692 = vmul.f32 %v2688, 0.5
    %v2693 = vadd.f32 %v2113, %v2691
    %v2694 = vadd.f32 %v2114, %v2692
    %v2695 = vsel %vm1782, %v2693, -inf
    %v2696 = vsel %vm1782, %v2694, -inf
    %v2697 = vmax.f32 %v2695, %v2696
    %v2698 = vrot.slane %v2697, 4
    %v2699 = vmax.f32 %v2697, %v2698
    %v2700 = vrot.slane %v2699, 2
    %v2701 = vmax.f32 %v2699, %v2700
    %v2702 = vrot.slane %v2701, 1
    %v2703 = vmax.f32 %v2701, %v2702
    %v2704 = vsub.f32 %v2693, %v2703
    %v2705 = vsub.f32 %v2694, %v2703
    %v2706 = vmul.f32 %v2704, 1.442695
    %v2707 = vpow.pop %v2706
    %v2708 = vmul.f32 %v2705, 1.442695
    %v2709 = vpow.pop %v2708
    %v2710 = vsel %vm1782, %v2707, 0.0
    %v2711 = vsel %vm1782, %v2709, 0.0
    %v2712 = vadd.f32 %v2710, %v2711
    %v2713 = vrot.slane %v2712, 4
    %v2714 = vadd.f32 %v2712, %v2713
    %v2715 = vrot.slane %v2714, 2
    %v2716 = vadd.f32 %v2714, %v2715
    %v2717 = vrot.slane %v2716, 1
    %v2718 = vadd.f32 %v2716, %v2717
    %v2719 = vrcp.pop %v2718
    %v2720 = vmul.f32 %v2707, %v2719
    %v2721 = vmul.f32 %v2709, %v2719
    %v2724 = vcombine.high %v2720, %v2720
    %v2726 = vunpack.c.l.s4 1966171168
    %v2727 = vunpack.c.0.s8 %v2726
    %v2728 = vlaneseq
    %v2729 = vshrl.u32 %v2728, 7
    %v2730 = vsub.s32 %v2727, %v2729
    %v2731 = vrot.slane %v2720, %v2730
    %v2733 = vunpack.c.l.s4 1966171168
    %v2734 = vunpack.c.0.s8 %v2733
    %v2735 = vlaneseq
    %v2736 = vshrl.u32 %v2735, 7
    %v2737 = vsub.s32 %v2734, %v2736
    %v2738 = vrot.slane %v2724, %v2737
    %v2739 = vcombine.high %v2731, %v2731
    %v2740 = vcombine.high %v2738, %v2738
    %v2742 = vunpack.c.l.s4 1966171168
    %v2743 = vunpack.c.0.s8 %v2742
    %v2744 = vlaneseq
    %v2745 = vshrl.u32 %v2744, 7
    %v2746 = vsub.s32 %v2743, %v2745
    %v2747 = vrot.slane %v2731, %v2746
    %v2749 = vunpack.c.l.s4 1966171168
    %v2750 = vunpack.c.0.s8 %v2749
    %v2751 = vlaneseq
    %v2752 = vshrl.u32 %v2751, 7
    %v2753 = vsub.s32 %v2750, %v2752
    %v2754 = vrot.slane %v2738, %v2753
    %v2756 = vunpack.c.l.s4 1966171168
    %v2757 = vunpack.c.0.s8 %v2756
    %v2758 = vlaneseq
    %v2759 = vshrl.u32 %v2758, 7
    %v2760 = vsub.s32 %v2757, %v2759
    %v2761 = vrot.slane %v2739, %v2760
    %v2763 = vunpack.c.l.s4 1966171168
    %v2764 = vunpack.c.0.s8 %v2763
    %v2765 = vlaneseq
    %v2766 = vshrl.u32 %v2765, 7
    %v2767 = vsub.s32 %v2764, %v2766
    %v2768 = vrot.slane %v2740, %v2767
    %v2769 = vcombine.high %v2747, %v2747
    %v2770 = vcombine.high %v2754, %v2754
    %v2771 = vcombine.high %v2761, %v2761
    %v2772 = vcombine.high %v2768, %v2768
    %v2773 = vcombine.high %v2721, %v2721
    %v2775 = vunpack.c.l.s4 1966171168
    %v2776 = vunpack.c.0.s8 %v2775
    %v2777 = vlaneseq
    %v2778 = vshrl.u32 %v2777, 7
    %v2779 = vsub.s32 %v2776, %v2778
    %v2780 = vrot.slane %v2721, %v2779
    %v2782 = vunpack.c.l.s4 1966171168
    %v2783 = vunpack.c.0.s8 %v2782
    %v2784 = vlaneseq
    %v2785 = vshrl.u32 %v2784, 7
    %v2786 = vsub.s32 %v2783, %v2785
    %v2787 = vrot.slane %v2773, %v2786
    %v2788 = vcombine.high %v2780, %v2780
    %v2789 = vcombine.high %v2787, %v2787
    %v2791 = vunpack.c.l.s4 1966171168
    %v2792 = vunpack.c.0.s8 %v2791
    %v2793 = vlaneseq
    %v2794 = vshrl.u32 %v2793, 7
    %v2795 = vsub.s32 %v2792, %v2794
    %v2796 = vrot.slane %v2780, %v2795
    %v2798 = vunpack.c.l.s4 1966171168
    %v2799 = vunpack.c.0.s8 %v2798
    %v2800 = vlaneseq
    %v2801 = vshrl.u32 %v2800, 7
    %v2802 = vsub.s32 %v2799, %v2801
    %v2803 = vrot.slane %v2787, %v2802
    %v2805 = vunpack.c.l.s4 1966171168
    %v2806 = vunpack.c.0.s8 %v2805
    %v2807 = vlaneseq
    %v2808 = vshrl.u32 %v2807, 7
    %v2809 = vsub.s32 %v2806, %v2808
    %v2810 = vrot.slane %v2788, %v2809
    %v2812 = vunpack.c.l.s4 1966171168
    %v2813 = vunpack.c.0.s8 %v2812
    %v2814 = vlaneseq
    %v2815 = vshrl.u32 %v2814, 7
    %v2816 = vsub.s32 %v2813, %v2815
    %v2817 = vrot.slane %v2789, %v2816
    %v2818 = vcombine.high %v2796, %v2796
    %v2819 = vcombine.high %v2803, %v2803
    %v2820 = vcombine.high %v2810, %v2810
    %v2821 = vcombine.high %v2817, %v2817
    %v2822 = vlaneseq
    %v2823 = vshrl.u32 %v2822, 7
    %v2824 = vsub.s32 0, %v2823
    %v2825 = vrot.slane %v2747, %v2824
    %v2826 = vlaneseq
    %v2827 = vshrl.u32 %v2826, 7
    %v2828 = vsub.s32 0, %v2827
    %v2829 = vrot.slane %v2761, %v2828
    %v2830 = vlaneseq
    %v2831 = vshrl.u32 %v2830, 7
    %v2832 = vsub.s32 0, %v2831
    %v2833 = vrot.slane %v2769, %v2832
    %v2834 = vlaneseq
    %v2835 = vshrl.u32 %v2834, 7
    %v2836 = vsub.s32 0, %v2835
    %v2837 = vrot.slane %v2771, %v2836
    %v2838 = vlaneseq
    %v2839 = vshrl.u32 %v2838, 7
    %v2840 = vsub.s32 0, %v2839
    %v2841 = vrot.slane %v2754, %v2840
    %v2842 = vlaneseq
    %v2843 = vshrl.u32 %v2842, 7
    %v2844 = vsub.s32 0, %v2843
    %v2845 = vrot.slane %v2768, %v2844
    %v2846 = vlaneseq
    %v2847 = vshrl.u32 %v2846, 7
    %v2848 = vsub.s32 0, %v2847
    %v2849 = vrot.slane %v2770, %v2848
    %v2850 = vlaneseq
    %v2851 = vshrl.u32 %v2850, 7
    %v2852 = vsub.s32 0, %v2851
    %v2853 = vrot.slane %v2772, %v2852
    %v2854 = vlaneseq
    %v2855 = vshrl.u32 %v2854, 7
    %v2856 = vsub.s32 0, %v2855
    %v2857 = vrot.slane %v2796, %v2856
    %v2858 = vlaneseq
    %v2859 = vshrl.u32 %v2858, 7
    %v2860 = vsub.s32 0, %v2859
    %v2861 = vrot.slane %v2810, %v2860
    %v2862 = vlaneseq
    %v2863 = vshrl.u32 %v2862, 7
    %v2864 = vsub.s32 0, %v2863
    %v2865 = vrot.slane %v2818, %v2864
    %v2866 = vlaneseq
    %v2867 = vshrl.u32 %v2866, 7
    %v2868 = vsub.s32 0, %v2867
    %v2869 = vrot.slane %v2820, %v2868
    %v2870 = vlaneseq
    %v2871 = vshrl.u32 %v2870, 7
    %v2872 = vsub.s32 0, %v2871
    %v2873 = vrot.slane %v2803, %v2872
    %v2874 = vlaneseq
    %v2875 = vshrl.u32 %v2874, 7
    %v2876 = vsub.s32 0, %v2875
    %v2877 = vrot.slane %v2817, %v2876
    %v2878 = vlaneseq
    %v2879 = vshrl.u32 %v2878, 7
    %v2880 = vsub.s32 0, %v2879
    %v2881 = vrot.slane %v2819, %v2880
    %v2882 = vlaneseq
    %v2883 = vshrl.u32 %v2882, 7
    %v2884 = vsub.s32 0, %v2883
    %v2885 = vrot.slane %v2821, %v2884
    %v2902 = vmul.f32 %v2825, %v273
    %v2903 = vmul.f32 %v2829, %v370
    %v2904 = vmul.f32 %v2833, %v467
    %v2905 = vmul.f32 %v2837, %v564
    %v2906 = vmul.f32 %v2841, %v661
    %v2907 = vmul.f32 %v2845, %v758
    %v2908 = vmul.f32 %v2849, %v855
    %v2909 = vmul.f32 %v2853, %v952
    %v2910 = vmul.f32 %v2857, %v1049
    %v2911 = vmul.f32 %v2861, %v1146
    %v2912 = vmul.f32 %v2865, %v1243
    %v2913 = vmul.f32 %v2869, %v1340
    %v2914 = vmul.f32 %v2873, %v1437
    %v2915 = vmul.f32 %v2877, %v1534
    %v2916 = vmul.f32 %v2881, %v1631
    %v2917 = vmul.f32 %v2885, %v1728
    %v2918 = vsel %vm1749, %v2902, 0.0
    %v2919 = vsel %vm1749, %v2903, 0.0
    %v2920 = vadd.f32 %v2918, %v2919
    %v2921 = vsel %vm1749, %v2904, 0.0
    %v2922 = vadd.f32 %v2920, %v2921
    %v2923 = vsel %vm1749, %v2905, 0.0
    %v2924 = vadd.f32 %v2922, %v2923
    %v2925 = vsel %vm1749, %v2906, 0.0
    %v2926 = vadd.f32 %v2924, %v2925
    %v2927 = vsel %vm1749, %v2907, 0.0
    %v2928 = vadd.f32 %v2926, %v2927
    %v2929 = vsel %vm1749, %v2908, 0.0
    %v2930 = vadd.f32 %v2928, %v2929
    %v2931 = vsel %vm1749, %v2909, 0.0
    %v2932 = vadd.f32 %v2930, %v2931
    %v2933 = vsel %vm1749, %v2910, 0.0
    %v2934 = vadd.f32 %v2932, %v2933
    %v2935 = vsel %vm1749, %v2911, 0.0
    %v2936 = vadd.f32 %v2934, %v2935
    %v2937 = vsel %vm1749, %v2912, 0.0
    %v2938 = vadd.f32 %v2936, %v2937
    %v2939 = vsel %vm1749, %v2913, 0.0
    %v2940 = vadd.f32 %v2938, %v2939
    %v2941 = vsel %vm1749, %v2914, 0.0
    %v2942 = vadd.f32 %v2940, %v2941
    %v2943 = vsel %vm1749, %v2915, 0.0
    %v2944 = vadd.f32 %v2942, %v2943
    %v2945 = vsel %vm1749, %v2916, 0.0
    %v2946 = vadd.f32 %v2944, %v2945
    %v2947 = vsel %vm1749, %v2917, 0.0
    %v2948 = vadd.f32 %v2946, %v2947
    %v2949 = vmul.f32 %v2948, %v2948
    %v2951 = vsel %vm1782, %v2949, 0
    %2953 = vmatprep.subr.mxu0 0.0
    %2954 = vmatpush1.msra.mxu0 %v170
    %2955 = vmatprep.subr.mxu0 0.0
    %2956 = vmatpush1.msra.mxu0 %v171
    %2957 = vmatprep.subr.mxu0 0.0
    %2958 = vmatpush1.msra.mxu0 %v172
    %2959 = vmatprep.subr.mxu0 0.0
    %2960 = vmatpush1.msra.mxu0 %v173
    %2961 = vmatprep.subr.mxu0 0.0
    %2962 = vmatpush1.msra.mxu0 %v174
    %2963 = vmatprep.subr.mxu0 0.0
    %2964 = vmatpush1.msra.mxu0 %v175
    %2965 = vmatprep.subr.mxu0 0.0
    %2966 = vmatpush1.msra.mxu0 %v176
    %2967 = vmatprep.subr.mxu0 0.0
    %2968 = vmatpush1.msra.mxu0 %v177
    %2969 = vmatprep.subr.mxu0 0.0
    %2970 = vmatpush1.msra.mxu0 0.0
    %2971 = vmatprep.subr.mxu0 0.0
    %2972 = vmatpush1.msra.mxu0 0.0
    %2973 = vmatprep.subr.mxu0 0.0
    %2974 = vmatpush1.msra.mxu0 0.0
    %2975 = vmatprep.subr.mxu0 0.0
    %2976 = vmatpush1.msra.mxu0 0.0
    %2977 = vmatprep.subr.mxu0 0.0
    %2978 = vmatpush1.msra.mxu0 0.0
    %2979 = vmatprep.subr.mxu0 0.0
    %2980 = vmatpush1.msra.mxu0 0.0
    %2981 = vmatprep.subr.mxu0 0.0
    %2982 = vmatpush1.msra.mxu0 0.0
    %2983 = vmatprep.subr.mxu0 0.0
    %2984 = vmatpush1.msra.mxu0 0.0
    %2985 = vmatprep.subr.mxu0 0.0
    %2986 = vmatpush1.msra.mxu0 0.0
    %2987 = vmatprep.subr.mxu0 0.0
    %2988 = vmatpush1.msra.mxu0 0.0
    %2989 = vmatprep.subr.mxu0 0.0
    %2990 = vmatpush1.msra.mxu0 0.0
    %2991 = vmatprep.subr.mxu0 0.0
    %2992 = vmatpush1.msra.mxu0 0.0
    %2993 = vmatprep.subr.mxu0 0.0
    %2994 = vmatpush1.msra.mxu0 0.0
    %2995 = vmatprep.subr.mxu0 0.0
    %2996 = vmatpush1.msra.mxu0 0.0
    %2997 = vmatprep.subr.mxu0 0.0
    %2998 = vmatpush1.msra.mxu0 0.0
    %2999 = vmatprep.subr.mxu0 0.0
    %3000 = vmatpush1.msra.mxu0 0.0
    %3001 = vmatprep.subr.mxu0 0.0
    %3002 = vmatpush1.msra.mxu0 0.0
    %3003 = vmatprep.subr.mxu0 0.0
    %3004 = vmatpush1.msra.mxu0 0.0
    %3005 = vmatprep.subr.mxu0 0.0
    %3006 = vmatpush1.msra.mxu0 0.0
    %3007 = vmatprep.subr.mxu0 0.0
    %3008 = vmatpush1.msra.mxu0 0.0
    %3009 = vmatprep.subr.mxu0 0.0
    %3010 = vmatpush1.msra.mxu0 0.0
    %3011 = vmatprep.subr.mxu0 0.0
    %3012 = vmatpush1.msra.mxu0 0.0
    %3013 = vmatprep.subr.mxu0 0.0
    %3014 = vmatpush1.msra.mxu0 0.0
    %3015 = vmatprep.subr.mxu0 0.0
    %3016 = vmatpush1.msra.mxu0 0.0
    %3017 = vmatprep.mubr.f32.mxu0 0.0
    %3018 = vmatmul.mubr.f32.gmra.mrb[0].mxu0 %v2951
    %v3019 = vpop.f32.mrb[0].mxu0
    %v3020 = vadd.f32 0.0, %v3019
    %v3021 = vpop.f32.mrb[0].mxu0
    %3022 = vdwg.mxu0
    %v3023 = vrsqrt.pop %v3020
    %v3024 = vmul.f32 %v3020, %v3023
    %vm3025 = vcmp.eq.f32.partialorder %v3020, inf
    %v3026 = vsel %vm3025, %v3020, %v3024
    %vm3027 = vcmp.eq.f32.partialorder %v3020, 0.0
    %v3028 = vand.u32 %v3020, 2147483648
    %v3029 = vsel %vm3027, %v3028, %v3026
    %v3030 = vadd.f32 %v3020, 1.0
    %v3031 = vrcp.pop %v3030
    %v3032 = vmul.f32 %v3029, %v3031
    %v3033 = vmul.f32 %v2948, %v3032
    %3034 = vst.msk [vmem:[#allocation2] sm:$0x3] %vm1749, %v3033
    // Predicated region
    $region18: #{tpu_custom_call.1} parent=1 // pred_check
      _
    $region19: #{tpu_custom_call.1} parent=1 // pred_check_branch
      %3036 = sbr.rel (0) target = $region21
    $region20: #{tpu_custom_call.1} parent=1 // pred_region
      %s3038 = ssub.s32 32, 32
      %3039 = vsyncadd [#allocation3], %s3038
      %s3041 = sshll.u32 [#allocation2], 4
      %s3042 = int_to_ptr.vmem [resolvable:$true] %s3041
      %3044 = dma.vmem_to_hbm [thread:$0]  %s3042, 32, %s4, [#allocation3]
    $region21: #{tpu_custom_call.1} parent=1 // pred_fallthru
      _
    // Predicated region
    $region22: #{tpu_custom_call.1} parent=1 // pred_check
      _
    $region23: #{tpu_custom_call.1} parent=1 // pred_check_branch
      %3046 = sbr.rel (0) target = $region25
    $region24: #{tpu_custom_call.1} parent=1 // pred_region
      %3047 = dma.done [#allocation3], 32
    $region25: #{tpu_custom_call.1} parent=1 // pred_fallthru
      _
    %3048 = vsyncpa [#allocation3], 1

</llo_original>
